<compile_context>
chip_gen: v5e
topology: v5e:2x2
jax: 0.10.0
libtpu: 0.0.40
codegen_flags: <defaults>
</compile_context>

<pallas_src>
import functools

import jax
import jax.numpy as jnp
from jax.experimental import pallas as pl
from jax.experimental.pallas import tpu as pltpu

C = 100      # fixed by nn.BatchNorm1d(100)
L = 64       # fixed by nn.Linear(200, emb): C * L / 32 == 200
EPS = 1e-5   # PyTorch BatchNorm default eps


def _stage1_dtype():
    """bf16 elementwise math on bf16-capable VPUs (v6e/v7x); f32 on v5e."""
    try:
        kind = jax.devices()[0].device_kind.lower()
    except Exception:
        return jnp.float32
    return jnp.float32 if "v5" in kind else jnp.bfloat16


def _make_kernel(stage1_dtype):
    cdt = stage1_dtype

    def kernel(x_ref, scale_ref, shift_ref, w_ref, b_ref, o_ref, ya_ref, yb_ref):
        nb = x_ref.shape[1]

        # Hoist per-stage (eval-mode, folded) BatchNorm constants once per block.
        s1 = jnp.broadcast_to(scale_ref[0].astype(cdt), (nb, C))
        t1 = jnp.broadcast_to(shift_ref[0].astype(cdt), (nb, C))
        s2, t2 = scale_ref[1], shift_ref[1]      # (1, C) f32
        s3, t3 = scale_ref[2], shift_ref[2]
        s4, t4 = scale_ref[3], shift_ref[3]

        # Stage 1: ReLU -> BN -> MaxPool1d(4).  Streamed in 16 chunks of 4 leading
        # time steps so the live set per step is one (4, nb, C) tile instead of the
        # whole (64, nb, C) block; each pooled row lands in the ya scratch.
        # TODO(synk): Dropout/Dropout2d are eval-mode identity; a training-mode
        # forward would need pltpu.prng_seed/prng_random_bits masks.
        for g in range(16):
            xg = x_ref[pl.ds(4 * g, 4)]
            if xg.dtype != cdt:
                xg = xg.astype(cdt)
            xg = jnp.maximum(xg, 0.0) * s1 + t1
            ya_ref[g] = jnp.max(xg, axis=0).astype(jnp.float32)

        # Stage 2: ReLU -> BN -> MaxPool1d(2)   (16 -> 8), f32.
        for g in range(8):
            xg = jnp.maximum(ya_ref[pl.ds(2 * g, 2)], 0.0) * s2 + t2
            yb_ref[g] = jnp.max(xg, axis=0)

        # Stage 3: ReLU -> BN -> MaxPool1d(2)   (8 -> 4).
        for g in range(4):
            xg = jnp.maximum(yb_ref[pl.ds(2 * g, 2)], 0.0) * s3 + t3
            ya_ref[g] = jnp.max(xg, axis=0)

        # Stage 4: ReLU -> BN -> MaxPool1d(2)   (4 -> 2), fused with Linear(200, emb).
        # PyTorch flattens (C, L=2) row-major (flat idx = 2*c + l); w_ref[l] holds the
        # (C, emb_pad) columns for final time slot l, so the linear is two MXU matmuls.
        z0 = jnp.max(jnp.maximum(ya_ref[pl.ds(0, 2)], 0.0) * s4 + t4, axis=0)
        z1 = jnp.max(jnp.maximum(ya_ref[pl.ds(2, 2)], 0.0) * s4 + t4, axis=0)
        out = jnp.dot(z0, w_ref[0], preferred_element_type=jnp.float32)
        out = out + jnp.dot(z1, w_ref[1], preferred_element_type=jnp.float32)
        o_ref[...] = out + b_ref[...]

    return kernel


def _choose_block_n(n, block_n):
    """Batch tile: big enough to amortize per-step pipeline overhead, >=2 grid steps
    when there is enough work (so the 'parallel' axis can use both v7x TCs),
    sublane-aligned (multiple of 8) unless the block covers the whole batch."""
    if n > block_n:
        return block_n
    if n < 64:
        return n                       # single block equal to the full batch dim
    nb = -(-n // 2)                    # ceil(n / 2) -> at least 2 grid steps
    return ((nb + 7) // 8) * 8


@functools.partial(jax.jit, static_argnames=("block_n", "stage1_dtype"))
def encoder_net(x_ncl, gamma, beta, mean, var, W, b, *, block_n=256,
                stage1_dtype=jnp.bfloat16):
    """x_ncl: (N, 100, 64); gamma/beta/mean/var: (4, 100); W: (emb, 200); b: (emb,)."""
    N = x_ncl.shape[0]
    emb = W.shape[0]
    emb_pad = ((emb + 127) // 128) * 128

    NB = _choose_block_n(N, block_n)
    n_pad = ((N + NB - 1) // NB) * NB

    # Fold eval-mode BatchNorm into per-channel scale/shift, shaped (4, 1, C) so the
    # kernel reads lane-resident (1, C) rows directly.
    scale = (gamma / jnp.sqrt(var + EPS)).astype(jnp.float32)             # (4, C)
    shift = (beta - mean * scale).astype(jnp.float32)                     # (4, C)
    scale = scale.reshape(4, 1, C)
    shift = shift.reshape(4, 1, C)

    # Pad the batch axis BEFORE the layout change so pad + transpose + bf16 cast fuse
    # into a single HBM pre-pass under jit (NCL -> LNC, half-width on the wire).
    if n_pad != N:
        x_ncl = jnp.pad(x_ncl, ((0, n_pad - N), (0, 0), (0, 0)))
    x_lnc = jnp.transpose(x_ncl, (2, 0, 1)).astype(jnp.bfloat16)          # (L, n_pad, C)

    # Linear weight as (2, C, emb_pad); leading index l in {0,1} matches PyTorch's
    # row-major (C, L) flatten (flat index = 2*c + l).  emb padded to lane-dense 128.
    w3 = jnp.transpose(W.reshape(emb, C, 2), (2, 1, 0)).astype(jnp.float32)
    w3 = jnp.pad(w3, ((0, 0), (0, 0), (0, emb_pad - emb)))
    b2 = jnp.pad(b.astype(jnp.float32), (0, emb_pad - emb)).reshape(1, emb_pad)

    # VMEM budget: double-buffered input/output blocks + scratch + weights, with 2x
    # headroom, capped well under v7x's 64 MiB physical VMEM.
    need = (2 * L * NB * C * 2 + 2 * NB * emb_pad * 4
            + 24 * NB * C * 4 + 2 * C * emb_pad * 4 + 4 * emb_pad)
    vmem_limit = int(min(48 * 2**20, max(32 * 2**20, 2 * need)))

    out = pl.pallas_call(
        _make_kernel(stage1_dtype),
        out_shape=jax.ShapeDtypeStruct((n_pad, emb_pad), jnp.float32),
        grid=(n_pad // NB,),
        in_specs=[
            pl.BlockSpec((L, NB, C), lambda n: (0, n, 0)),
            pl.BlockSpec((4, 1, C), lambda n: (0, 0, 0)),
            pl.BlockSpec((4, 1, C), lambda n: (0, 0, 0)),
            pl.BlockSpec((2, C, emb_pad), lambda n: (0, 0, 0)),
            pl.BlockSpec((1, emb_pad), lambda n: (0, 0)),
        ],
        out_specs=pl.BlockSpec((NB, emb_pad), lambda n: (n, 0)),
        scratch_shapes=[
            pltpu.VMEM((16, NB, C), jnp.float32),   # stage-1 pooled activations
            pltpu.VMEM((8, NB, C), jnp.float32),    # stage-2 pooled activations
        ],
        compiler_params=pltpu.CompilerParams(
            dimension_semantics=("parallel",),
            vmem_limit_bytes=vmem_limit,
        ),
    )(x_lnc, scale, shift, w3, b2)

    return out[:N, :emb]


def reference(x_ncl, gamma, beta, mean, var, W, b):
    """Pure-JAX mirror of the PyTorch forward (NCL layout, f32)."""
    x = x_ncl

    def stage(x, i, pool):
        x = jnp.maximum(x, 0.0)
        g = gamma[i][None, :, None]
        bb = beta[i][None, :, None]
        mu = mean[i][None, :, None]
        vv = var[i][None, :, None]
        x = (x - mu) / jnp.sqrt(vv + EPS) * g + bb
        n, c, l = x.shape
        return jnp.max(x.reshape(n, c, l // pool, pool), axis=-1)

    x = stage(x, 0, 4)
    x = stage(x, 1, 2)
    x = stage(x, 2, 2)
    x = stage(x, 3, 2)
    flat = x.reshape(x.shape[0], -1)          # (N, 200), PyTorch (C, L) order
    return flat @ W.T + b[None, :]


if __name__ == "__main__":
    key = jax.random.PRNGKey(0)
    emb_dim = 32            # `filters` is irrelevant: conv weights are never applied
    ks = jax.random.split(key, 7)

    gamma = 1.0 + 0.1 * jax.random.normal(ks[1], (4, C), dtype=jnp.float32)
    beta  = 0.1 * jax.random.normal(ks[2], (4, C), dtype=jnp.float32)
    mean  = 0.1 * jax.random.normal(ks[3], (4, C), dtype=jnp.float32)
    var   = jax.random.uniform(ks[4], (4, C), dtype=jnp.float32, minval=0.5, maxval=1.5)
    W     = jax.random.normal(ks[5], (emb_dim, 2 * C), dtype=jnp.float32) / jnp.sqrt(2.0 * C)
    b     = 0.01 * jax.random.normal(ks[6], (emb_dim,), dtype=jnp.float32)

    sdt = _stage1_dtype()
    # Kernel rounds the input to bf16 on the wire (reference uses the same rounded
    # input); on v6e/v7x stage-1 math also runs in bf16, so allow the extra rounding.
    tol = 2e-3 if sdt == jnp.float32 else 3e-2

    def check(N):
        x = jax.random.normal(ks[0], (N, C, L), dtype=jnp.float32)
        out = jax.block_until_ready(
            encoder_net(x, gamma, beta, mean, var, W, b, stage1_dtype=sdt))
        x_q = x.astype(jnp.bfloat16).astype(jnp.float32)
        ref = reference(x_q, gamma, beta, mean, var, W, b)
        assert out.shape == (N, emb_dim), out.shape
        err = float(jnp.max(jnp.abs(out - ref)))
        assert err < tol, (err, tol)

    check(2)      # small case from the original test (single full-batch block)
    check(200)    # exercises NB=104 batching, batch-tail padding, 2-step grid
    print("KERNEL_OK")
</pallas_src>

<mosaic_0001>
module attributes {stable_mosaic.version = 11 : i64} {
  func.func @kernel(%arg0: i32, %arg1: memref<64x2x100xbf16, #tpu.memory_space<vmem>>, %arg2: memref<4x1x100xf32, #tpu.memory_space<vmem>>, %arg3: memref<4x1x100xf32, #tpu.memory_space<vmem>>, %arg4: memref<2x100x128xf32, #tpu.memory_space<vmem>>, %arg5: memref<1x128xf32, #tpu.memory_space<vmem>>, %arg6: memref<2x128xf32, #tpu.memory_space<vmem>>, %arg7: memref<16x2x100xf32, #tpu.memory_space<vmem>>, %arg8: memref<8x2x100xf32, #tpu.memory_space<vmem>>) attributes {dimension_semantics = [#tpu.dimension_semantics<parallel>], iteration_bounds = array<i64: 1>, scalar_prefetch = 0 : i64, scratch_operands = 2 : i64, tpu.core_type = #tpu.core_type<tc>, window_params = [{transform_indices = @transform_0, window_bounds = array<i64: 64, 2, 100>}, {pipeline_mode = #tpu.pipeline_mode<synchronous>, transform_indices = @transform_1, window_bounds = array<i64: 4, 1, 100>}, {pipeline_mode = #tpu.pipeline_mode<synchronous>, transform_indices = @transform_2, window_bounds = array<i64: 4, 1, 100>}, {pipeline_mode = #tpu.pipeline_mode<synchronous>, transform_indices = @transform_3, window_bounds = array<i64: 2, 100, 128>}, {pipeline_mode = #tpu.pipeline_mode<synchronous>, transform_indices = @transform_4, window_bounds = array<i64: 1, 128>}, {transform_indices = @transform_5, window_bounds = array<i64: 2, 128>}]} {
    %c0 = arith.constant 0 : index
    %c0_0 = arith.constant 0 : index
    %c0_1 = arith.constant 0 : index
    %0 = vector.load %arg2[%c0, %c0_0, %c0_1] : memref<4x1x100xf32, #tpu.memory_space<vmem>>, vector<1x1x100xf32>
    %1 = vector.shape_cast %0 : vector<1x1x100xf32> to vector<1x100xf32>
    %2 = arith.truncf %1 : vector<1x100xf32> to vector<1x100xbf16>
    %3 = vector.shape_cast %2 : vector<1x100xbf16> to vector<1x100xbf16>
    %4 = vector.broadcast %3 : vector<1x100xbf16> to vector<2x100xbf16>
    %c0_2 = arith.constant 0 : index
    %c0_3 = arith.constant 0 : index
    %c0_4 = arith.constant 0 : index
    %5 = vector.load %arg3[%c0_2, %c0_3, %c0_4] : memref<4x1x100xf32, #tpu.memory_space<vmem>>, vector<1x1x100xf32>
    %6 = vector.shape_cast %5 : vector<1x1x100xf32> to vector<1x100xf32>
    %7 = arith.truncf %6 : vector<1x100xf32> to vector<1x100xbf16>
    %8 = vector.shape_cast %7 : vector<1x100xbf16> to vector<1x100xbf16>
    %9 = vector.broadcast %8 : vector<1x100xbf16> to vector<2x100xbf16>
    %c1 = arith.constant 1 : index
    %c0_5 = arith.constant 0 : index
    %c0_6 = arith.constant 0 : index
    %10 = vector.load %arg2[%c1, %c0_5, %c0_6] : memref<4x1x100xf32, #tpu.memory_space<vmem>>, vector<1x1x100xf32>
    %11 = vector.shape_cast %10 : vector<1x1x100xf32> to vector<1x100xf32>
    %c1_7 = arith.constant 1 : index
    %c0_8 = arith.constant 0 : index
    %c0_9 = arith.constant 0 : index
    %12 = vector.load %arg3[%c1_7, %c0_8, %c0_9] : memref<4x1x100xf32, #tpu.memory_space<vmem>>, vector<1x1x100xf32>
    %13 = vector.shape_cast %12 : vector<1x1x100xf32> to vector<1x100xf32>
    %c2 = arith.constant 2 : index
    %c0_10 = arith.constant 0 : index
    %c0_11 = arith.constant 0 : index
    %14 = vector.load %arg2[%c2, %c0_10, %c0_11] : memref<4x1x100xf32, #tpu.memory_space<vmem>>, vector<1x1x100xf32>
    %15 = vector.shape_cast %14 : vector<1x1x100xf32> to vector<1x100xf32>
    %c2_12 = arith.constant 2 : index
    %c0_13 = arith.constant 0 : index
    %c0_14 = arith.constant 0 : index
    %16 = vector.load %arg3[%c2_12, %c0_13, %c0_14] : memref<4x1x100xf32, #tpu.memory_space<vmem>>, vector<1x1x100xf32>
    %17 = vector.shape_cast %16 : vector<1x1x100xf32> to vector<1x100xf32>
    %c3 = arith.constant 3 : index
    %c0_15 = arith.constant 0 : index
    %c0_16 = arith.constant 0 : index
    %18 = vector.load %arg2[%c3, %c0_15, %c0_16] : memref<4x1x100xf32, #tpu.memory_space<vmem>>, vector<1x1x100xf32>
    %19 = vector.shape_cast %18 : vector<1x1x100xf32> to vector<1x100xf32>
    %c3_17 = arith.constant 3 : index
    %c0_18 = arith.constant 0 : index
    %c0_19 = arith.constant 0 : index
    %20 = vector.load %arg3[%c3_17, %c0_18, %c0_19] : memref<4x1x100xf32, #tpu.memory_space<vmem>>, vector<1x1x100xf32>
    %21 = vector.shape_cast %20 : vector<1x1x100xf32> to vector<1x100xf32>
    %c0_20 = arith.constant 0 : index
    %c0_21 = arith.constant 0 : index
    %c0_22 = arith.constant 0 : index
    %22 = vector.load %arg1[%c0_20, %c0_21, %c0_22] : memref<64x2x100xbf16, #tpu.memory_space<vmem>>, vector<4x2x100xbf16>
    %cst = arith.constant 0.000000e+00 : bf16
    %23 = vector.broadcast %cst : bf16 to vector<4x2x100xbf16>
    %24 = arith.maximumf %22, %23 : vector<4x2x100xbf16>
    %25 = vector.shape_cast %4 : vector<2x100xbf16> to vector<1x2x100xbf16>
    %26 = vector.broadcast %25 : vector<1x2x100xbf16> to vector<4x2x100xbf16>
    %27 = arith.mulf %24, %26 : vector<4x2x100xbf16>
    %28 = vector.shape_cast %9 : vector<2x100xbf16> to vector<1x2x100xbf16>
    %29 = vector.broadcast %28 : vector<1x2x100xbf16> to vector<4x2x100xbf16>
    %30 = arith.addf %27, %29 : vector<4x2x100xbf16>
    %cst_23 = arith.constant dense<0xFF80> : vector<2x100xbf16>
    %31 = vector.multi_reduction <maximumf>, %30, %cst_23 [0] : vector<4x2x100xbf16> to vector<2x100xbf16>
    %32 = arith.extf %31 : vector<2x100xbf16> to vector<2x100xf32>
    %c0_24 = arith.constant 0 : index
    %c0_25 = arith.constant 0 : index
    %c0_26 = arith.constant 0 : index
    %33 = vector.load %arg7[%c0_24, %c0_25, %c0_26] : memref<16x2x100xf32, #tpu.memory_space<vmem>>, vector<1x2x100xf32>
    %34 = vector.shape_cast %33 : vector<1x2x100xf32> to vector<2x100xf32>
    %35 = vector.shape_cast %32 : vector<2x100xf32> to vector<1x2x100xf32>
    tpu.vector_store %arg7[%c0_24, %c0_25, %c0_26], %35 {strides = array<i32>} : memref<16x2x100xf32, #tpu.memory_space<vmem>>, vector<1x2x100xf32>,
    %c4 = arith.constant 4 : index
    %c0_27 = arith.constant 0 : index
    %c0_28 = arith.constant 0 : index
    %36 = vector.load %arg1[%c4, %c0_27, %c0_28] : memref<64x2x100xbf16, #tpu.memory_space<vmem>>, vector<4x2x100xbf16>
    %cst_29 = arith.constant 0.000000e+00 : bf16
    %37 = vector.broadcast %cst_29 : bf16 to vector<4x2x100xbf16>
    %38 = arith.maximumf %36, %37 : vector<4x2x100xbf16>
    %39 = vector.shape_cast %4 : vector<2x100xbf16> to vector<1x2x100xbf16>
    %40 = vector.broadcast %39 : vector<1x2x100xbf16> to vector<4x2x100xbf16>
    %41 = arith.mulf %38, %40 : vector<4x2x100xbf16>
    %42 = vector.shape_cast %9 : vector<2x100xbf16> to vector<1x2x100xbf16>
    %43 = vector.broadcast %42 : vector<1x2x100xbf16> to vector<4x2x100xbf16>
    %44 = arith.addf %41, %43 : vector<4x2x100xbf16>
    %cst_30 = arith.constant dense<0xFF80> : vector<2x100xbf16>
    %45 = vector.multi_reduction <maximumf>, %44, %cst_30 [0] : vector<4x2x100xbf16> to vector<2x100xbf16>
    %46 = arith.extf %45 : vector<2x100xbf16> to vector<2x100xf32>
    %c1_31 = arith.constant 1 : index
    %c0_32 = arith.constant 0 : index
    %c0_33 = arith.constant 0 : index
    %47 = vector.load %arg7[%c1_31, %c0_32, %c0_33] : memref<16x2x100xf32, #tpu.memory_space<vmem>>, vector<1x2x100xf32>
    %48 = vector.shape_cast %47 : vector<1x2x100xf32> to vector<2x100xf32>
    %49 = vector.shape_cast %46 : vector<2x100xf32> to vector<1x2x100xf32>
    tpu.vector_store %arg7[%c1_31, %c0_32, %c0_33], %49 {strides = array<i32>} : memref<16x2x100xf32, #tpu.memory_space<vmem>>, vector<1x2x100xf32>,
    %c8 = arith.constant 8 : index
    %c0_34 = arith.constant 0 : index
    %c0_35 = arith.constant 0 : index
    %50 = vector.load %arg1[%c8, %c0_34, %c0_35] : memref<64x2x100xbf16, #tpu.memory_space<vmem>>, vector<4x2x100xbf16>
    %cst_36 = arith.constant 0.000000e+00 : bf16
    %51 = vector.broadcast %cst_36 : bf16 to vector<4x2x100xbf16>
    %52 = arith.maximumf %50, %51 : vector<4x2x100xbf16>
    %53 = vector.shape_cast %4 : vector<2x100xbf16> to vector<1x2x100xbf16>
    %54 = vector.broadcast %53 : vector<1x2x100xbf16> to vector<4x2x100xbf16>
    %55 = arith.mulf %52, %54 : vector<4x2x100xbf16>
    %56 = vector.shape_cast %9 : vector<2x100xbf16> to vector<1x2x100xbf16>
    %57 = vector.broadcast %56 : vector<1x2x100xbf16> to vector<4x2x100xbf16>
    %58 = arith.addf %55, %57 : vector<4x2x100xbf16>
    %cst_37 = arith.constant dense<0xFF80> : vector<2x100xbf16>
    %59 = vector.multi_reduction <maximumf>, %58, %cst_37 [0] : vector<4x2x100xbf16> to vector<2x100xbf16>
    %60 = arith.extf %59 : vector<2x100xbf16> to vector<2x100xf32>
    %c2_38 = arith.constant 2 : index
    %c0_39 = arith.constant 0 : index
    %c0_40 = arith.constant 0 : index
    %61 = vector.load %arg7[%c2_38, %c0_39, %c0_40] : memref<16x2x100xf32, #tpu.memory_space<vmem>>, vector<1x2x100xf32>
    %62 = vector.shape_cast %61 : vector<1x2x100xf32> to vector<2x100xf32>
    %63 = vector.shape_cast %60 : vector<2x100xf32> to vector<1x2x100xf32>
    tpu.vector_store %arg7[%c2_38, %c0_39, %c0_40], %63 {strides = array<i32>} : memref<16x2x100xf32, #tpu.memory_space<vmem>>, vector<1x2x100xf32>,
    %c12 = arith.constant 12 : index
    %c0_41 = arith.constant 0 : index
    %c0_42 = arith.constant 0 : index
    %64 = vector.load %arg1[%c12, %c0_41, %c0_42] : memref<64x2x100xbf16, #tpu.memory_space<vmem>>, vector<4x2x100xbf16>
    %cst_43 = arith.constant 0.000000e+00 : bf16
    %65 = vector.broadcast %cst_43 : bf16 to vector<4x2x100xbf16>
    %66 = arith.maximumf %64, %65 : vector<4x2x100xbf16>
    %67 = vector.shape_cast %4 : vector<2x100xbf16> to vector<1x2x100xbf16>
    %68 = vector.broadcast %67 : vector<1x2x100xbf16> to vector<4x2x100xbf16>
    %69 = arith.mulf %66, %68 : vector<4x2x100xbf16>
    %70 = vector.shape_cast %9 : vector<2x100xbf16> to vector<1x2x100xbf16>
    %71 = vector.broadcast %70 : vector<1x2x100xbf16> to vector<4x2x100xbf16>
    %72 = arith.addf %69, %71 : vector<4x2x100xbf16>
    %cst_44 = arith.constant dense<0xFF80> : vector<2x100xbf16>
    %73 = vector.multi_reduction <maximumf>, %72, %cst_44 [0] : vector<4x2x100xbf16> to vector<2x100xbf16>
    %74 = arith.extf %73 : vector<2x100xbf16> to vector<2x100xf32>
    %c3_45 = arith.constant 3 : index
    %c0_46 = arith.constant 0 : index
    %c0_47 = arith.constant 0 : index
    %75 = vector.load %arg7[%c3_45, %c0_46, %c0_47] : memref<16x2x100xf32, #tpu.memory_space<vmem>>, vector<1x2x100xf32>
    %76 = vector.shape_cast %75 : vector<1x2x100xf32> to vector<2x100xf32>
    %77 = vector.shape_cast %74 : vector<2x100xf32> to vector<1x2x100xf32>
    tpu.vector_store %arg7[%c3_45, %c0_46, %c0_47], %77 {strides = array<i32>} : memref<16x2x100xf32, #tpu.memory_space<vmem>>, vector<1x2x100xf32>,
    %c16 = arith.constant 16 : index
    %c0_48 = arith.constant 0 : index
    %c0_49 = arith.constant 0 : index
    %78 = vector.load %arg1[%c16, %c0_48, %c0_49] : memref<64x2x100xbf16, #tpu.memory_space<vmem>>, vector<4x2x100xbf16>
    %cst_50 = arith.constant 0.000000e+00 : bf16
    %79 = vector.broadcast %cst_50 : bf16 to vector<4x2x100xbf16>
    %80 = arith.maximumf %78, %79 : vector<4x2x100xbf16>
    %81 = vector.shape_cast %4 : vector<2x100xbf16> to vector<1x2x100xbf16>
    %82 = vector.broadcast %81 : vector<1x2x100xbf16> to vector<4x2x100xbf16>
    %83 = arith.mulf %80, %82 : vector<4x2x100xbf16>
    %84 = vector.shape_cast %9 : vector<2x100xbf16> to vector<1x2x100xbf16>
    %85 = vector.broadcast %84 : vector<1x2x100xbf16> to vector<4x2x100xbf16>
    %86 = arith.addf %83, %85 : vector<4x2x100xbf16>
    %cst_51 = arith.constant dense<0xFF80> : vector<2x100xbf16>
    %87 = vector.multi_reduction <maximumf>, %86, %cst_51 [0] : vector<4x2x100xbf16> to vector<2x100xbf16>
    %88 = arith.extf %87 : vector<2x100xbf16> to vector<2x100xf32>
    %c4_52 = arith.constant 4 : index
    %c0_53 = arith.constant 0 : index
    %c0_54 = arith.constant 0 : index
    %89 = vector.load %arg7[%c4_52, %c0_53, %c0_54] : memref<16x2x100xf32, #tpu.memory_space<vmem>>, vector<1x2x100xf32>
    %90 = vector.shape_cast %89 : vector<1x2x100xf32> to vector<2x100xf32>
    %91 = vector.shape_cast %88 : vector<2x100xf32> to vector<1x2x100xf32>
    tpu.vector_store %arg7[%c4_52, %c0_53, %c0_54], %91 {strides = array<i32>} : memref<16x2x100xf32, #tpu.memory_space<vmem>>, vector<1x2x100xf32>,
    %c20 = arith.constant 20 : index
    %c0_55 = arith.constant 0 : index
    %c0_56 = arith.constant 0 : index
    %92 = vector.load %arg1[%c20, %c0_55, %c0_56] : memref<64x2x100xbf16, #tpu.memory_space<vmem>>, vector<4x2x100xbf16>
    %cst_57 = arith.constant 0.000000e+00 : bf16
    %93 = vector.broadcast %cst_57 : bf16 to vector<4x2x100xbf16>
    %94 = arith.maximumf %92, %93 : vector<4x2x100xbf16>
    %95 = vector.shape_cast %4 : vector<2x100xbf16> to vector<1x2x100xbf16>
    %96 = vector.broadcast %95 : vector<1x2x100xbf16> to vector<4x2x100xbf16>
    %97 = arith.mulf %94, %96 : vector<4x2x100xbf16>
    %98 = vector.shape_cast %9 : vector<2x100xbf16> to vector<1x2x100xbf16>
    %99 = vector.broadcast %98 : vector<1x2x100xbf16> to vector<4x2x100xbf16>
    %100 = arith.addf %97, %99 : vector<4x2x100xbf16>
    %cst_58 = arith.constant dense<0xFF80> : vector<2x100xbf16>
    %101 = vector.multi_reduction <maximumf>, %100, %cst_58 [0] : vector<4x2x100xbf16> to vector<2x100xbf16>
    %102 = arith.extf %101 : vector<2x100xbf16> to vector<2x100xf32>
    %c5 = arith.constant 5 : index
    %c0_59 = arith.constant 0 : index
    %c0_60 = arith.constant 0 : index
    %103 = vector.load %arg7[%c5, %c0_59, %c0_60] : memref<16x2x100xf32, #tpu.memory_space<vmem>>, vector<1x2x100xf32>
    %104 = vector.shape_cast %103 : vector<1x2x100xf32> to vector<2x100xf32>
    %105 = vector.shape_cast %102 : vector<2x100xf32> to vector<1x2x100xf32>
    tpu.vector_store %arg7[%c5, %c0_59, %c0_60], %105 {strides = array<i32>} : memref<16x2x100xf32, #tpu.memory_space<vmem>>, vector<1x2x100xf32>,
    %c24 = arith.constant 24 : index
    %c0_61 = arith.constant 0 : index
    %c0_62 = arith.constant 0 : index
    %106 = vector.load %arg1[%c24, %c0_61, %c0_62] : memref<64x2x100xbf16, #tpu.memory_space<vmem>>, vector<4x2x100xbf16>
    %cst_63 = arith.constant 0.000000e+00 : bf16
    %107 = vector.broadcast %cst_63 : bf16 to vector<4x2x100xbf16>
    %108 = arith.maximumf %106, %107 : vector<4x2x100xbf16>
    %109 = vector.shape_cast %4 : vector<2x100xbf16> to vector<1x2x100xbf16>
    %110 = vector.broadcast %109 : vector<1x2x100xbf16> to vector<4x2x100xbf16>
    %111 = arith.mulf %108, %110 : vector<4x2x100xbf16>
    %112 = vector.shape_cast %9 : vector<2x100xbf16> to vector<1x2x100xbf16>
    %113 = vector.broadcast %112 : vector<1x2x100xbf16> to vector<4x2x100xbf16>
    %114 = arith.addf %111, %113 : vector<4x2x100xbf16>
    %cst_64 = arith.constant dense<0xFF80> : vector<2x100xbf16>
    %115 = vector.multi_reduction <maximumf>, %114, %cst_64 [0] : vector<4x2x100xbf16> to vector<2x100xbf16>
    %116 = arith.extf %115 : vector<2x100xbf16> to vector<2x100xf32>
    %c6 = arith.constant 6 : index
    %c0_65 = arith.constant 0 : index
    %c0_66 = arith.constant 0 : index
    %117 = vector.load %arg7[%c6, %c0_65, %c0_66] : memref<16x2x100xf32, #tpu.memory_space<vmem>>, vector<1x2x100xf32>
    %118 = vector.shape_cast %117 : vector<1x2x100xf32> to vector<2x100xf32>
    %119 = vector.shape_cast %116 : vector<2x100xf32> to vector<1x2x100xf32>
    tpu.vector_store %arg7[%c6, %c0_65, %c0_66], %119 {strides = array<i32>} : memref<16x2x100xf32, #tpu.memory_space<vmem>>, vector<1x2x100xf32>,
    %c28 = arith.constant 28 : index
    %c0_67 = arith.constant 0 : index
    %c0_68 = arith.constant 0 : index
    %120 = vector.load %arg1[%c28, %c0_67, %c0_68] : memref<64x2x100xbf16, #tpu.memory_space<vmem>>, vector<4x2x100xbf16>
    %cst_69 = arith.constant 0.000000e+00 : bf16
    %121 = vector.broadcast %cst_69 : bf16 to vector<4x2x100xbf16>
    %122 = arith.maximumf %120, %121 : vector<4x2x100xbf16>
    %123 = vector.shape_cast %4 : vector<2x100xbf16> to vector<1x2x100xbf16>
    %124 = vector.broadcast %123 : vector<1x2x100xbf16> to vector<4x2x100xbf16>
    %125 = arith.mulf %122, %124 : vector<4x2x100xbf16>
    %126 = vector.shape_cast %9 : vector<2x100xbf16> to vector<1x2x100xbf16>
    %127 = vector.broadcast %126 : vector<1x2x100xbf16> to vector<4x2x100xbf16>
    %128 = arith.addf %125, %127 : vector<4x2x100xbf16>
    %cst_70 = arith.constant dense<0xFF80> : vector<2x100xbf16>
    %129 = vector.multi_reduction <maximumf>, %128, %cst_70 [0] : vector<4x2x100xbf16> to vector<2x100xbf16>
    %130 = arith.extf %129 : vector<2x100xbf16> to vector<2x100xf32>
    %c7 = arith.constant 7 : index
    %c0_71 = arith.constant 0 : index
    %c0_72 = arith.constant 0 : index
    %131 = vector.load %arg7[%c7, %c0_71, %c0_72] : memref<16x2x100xf32, #tpu.memory_space<vmem>>, vector<1x2x100xf32>
    %132 = vector.shape_cast %131 : vector<1x2x100xf32> to vector<2x100xf32>
    %133 = vector.shape_cast %130 : vector<2x100xf32> to vector<1x2x100xf32>
    tpu.vector_store %arg7[%c7, %c0_71, %c0_72], %133 {strides = array<i32>} : memref<16x2x100xf32, #tpu.memory_space<vmem>>, vector<1x2x100xf32>,
    %c32 = arith.constant 32 : index
    %c0_73 = arith.constant 0 : index
    %c0_74 = arith.constant 0 : index
    %134 = vector.load %arg1[%c32, %c0_73, %c0_74] : memref<64x2x100xbf16, #tpu.memory_space<vmem>>, vector<4x2x100xbf16>
    %cst_75 = arith.constant 0.000000e+00 : bf16
    %135 = vector.broadcast %cst_75 : bf16 to vector<4x2x100xbf16>
    %136 = arith.maximumf %134, %135 : vector<4x2x100xbf16>
    %137 = vector.shape_cast %4 : vector<2x100xbf16> to vector<1x2x100xbf16>
    %138 = vector.broadcast %137 : vector<1x2x100xbf16> to vector<4x2x100xbf16>
    %139 = arith.mulf %136, %138 : vector<4x2x100xbf16>
    %140 = vector.shape_cast %9 : vector<2x100xbf16> to vector<1x2x100xbf16>
    %141 = vector.broadcast %140 : vector<1x2x100xbf16> to vector<4x2x100xbf16>
    %142 = arith.addf %139, %141 : vector<4x2x100xbf16>
    %cst_76 = arith.constant dense<0xFF80> : vector<2x100xbf16>
    %143 = vector.multi_reduction <maximumf>, %142, %cst_76 [0] : vector<4x2x100xbf16> to vector<2x100xbf16>
    %144 = arith.extf %143 : vector<2x100xbf16> to vector<2x100xf32>
    %c8_77 = arith.constant 8 : index
    %c0_78 = arith.constant 0 : index
    %c0_79 = arith.constant 0 : index
    %145 = vector.load %arg7[%c8_77, %c0_78, %c0_79] : memref<16x2x100xf32, #tpu.memory_space<vmem>>, vector<1x2x100xf32>
    %146 = vector.shape_cast %145 : vector<1x2x100xf32> to vector<2x100xf32>
    %147 = vector.shape_cast %144 : vector<2x100xf32> to vector<1x2x100xf32>
    tpu.vector_store %arg7[%c8_77, %c0_78, %c0_79], %147 {strides = array<i32>} : memref<16x2x100xf32, #tpu.memory_space<vmem>>, vector<1x2x100xf32>,
    %c36 = arith.constant 36 : index
    %c0_80 = arith.constant 0 : index
    %c0_81 = arith.constant 0 : index
    %148 = vector.load %arg1[%c36, %c0_80, %c0_81] : memref<64x2x100xbf16, #tpu.memory_space<vmem>>, vector<4x2x100xbf16>
    %cst_82 = arith.constant 0.000000e+00 : bf16
    %149 = vector.broadcast %cst_82 : bf16 to vector<4x2x100xbf16>
    %150 = arith.maximumf %148, %149 : vector<4x2x100xbf16>
    %151 = vector.shape_cast %4 : vector<2x100xbf16> to vector<1x2x100xbf16>
    %152 = vector.broadcast %151 : vector<1x2x100xbf16> to vector<4x2x100xbf16>
    %153 = arith.mulf %150, %152 : vector<4x2x100xbf16>
    %154 = vector.shape_cast %9 : vector<2x100xbf16> to vector<1x2x100xbf16>
    %155 = vector.broadcast %154 : vector<1x2x100xbf16> to vector<4x2x100xbf16>
    %156 = arith.addf %153, %155 : vector<4x2x100xbf16>
    %cst_83 = arith.constant dense<0xFF80> : vector<2x100xbf16>
    %157 = vector.multi_reduction <maximumf>, %156, %cst_83 [0] : vector<4x2x100xbf16> to vector<2x100xbf16>
    %158 = arith.extf %157 : vector<2x100xbf16> to vector<2x100xf32>
    %c9 = arith.constant 9 : index
    %c0_84 = arith.constant 0 : index
    %c0_85 = arith.constant 0 : index
    %159 = vector.load %arg7[%c9, %c0_84, %c0_85] : memref<16x2x100xf32, #tpu.memory_space<vmem>>, vector<1x2x100xf32>
    %160 = vector.shape_cast %159 : vector<1x2x100xf32> to vector<2x100xf32>
    %161 = vector.shape_cast %158 : vector<2x100xf32> to vector<1x2x100xf32>
    tpu.vector_store %arg7[%c9, %c0_84, %c0_85], %161 {strides = array<i32>} : memref<16x2x100xf32, #tpu.memory_space<vmem>>, vector<1x2x100xf32>,
    %c40 = arith.constant 40 : index
    %c0_86 = arith.constant 0 : index
    %c0_87 = arith.constant 0 : index
    %162 = vector.load %arg1[%c40, %c0_86, %c0_87] : memref<64x2x100xbf16, #tpu.memory_space<vmem>>, vector<4x2x100xbf16>
    %cst_88 = arith.constant 0.000000e+00 : bf16
    %163 = vector.broadcast %cst_88 : bf16 to vector<4x2x100xbf16>
    %164 = arith.maximumf %162, %163 : vector<4x2x100xbf16>
    %165 = vector.shape_cast %4 : vector<2x100xbf16> to vector<1x2x100xbf16>
    %166 = vector.broadcast %165 : vector<1x2x100xbf16> to vector<4x2x100xbf16>
    %167 = arith.mulf %164, %166 : vector<4x2x100xbf16>
    %168 = vector.shape_cast %9 : vector<2x100xbf16> to vector<1x2x100xbf16>
    %169 = vector.broadcast %168 : vector<1x2x100xbf16> to vector<4x2x100xbf16>
    %170 = arith.addf %167, %169 : vector<4x2x100xbf16>
    %cst_89 = arith.constant dense<0xFF80> : vector<2x100xbf16>
    %171 = vector.multi_reduction <maximumf>, %170, %cst_89 [0] : vector<4x2x100xbf16> to vector<2x100xbf16>
    %172 = arith.extf %171 : vector<2x100xbf16> to vector<2x100xf32>
    %c10 = arith.constant 10 : index
    %c0_90 = arith.constant 0 : index
    %c0_91 = arith.constant 0 : index
    %173 = vector.load %arg7[%c10, %c0_90, %c0_91] : memref<16x2x100xf32, #tpu.memory_space<vmem>>, vector<1x2x100xf32>
    %174 = vector.shape_cast %173 : vector<1x2x100xf32> to vector<2x100xf32>
    %175 = vector.shape_cast %172 : vector<2x100xf32> to vector<1x2x100xf32>
    tpu.vector_store %arg7[%c10, %c0_90, %c0_91], %175 {strides = array<i32>} : memref<16x2x100xf32, #tpu.memory_space<vmem>>, vector<1x2x100xf32>,
    %c44 = arith.constant 44 : index
    %c0_92 = arith.constant 0 : index
    %c0_93 = arith.constant 0 : index
    %176 = vector.load %arg1[%c44, %c0_92, %c0_93] : memref<64x2x100xbf16, #tpu.memory_space<vmem>>, vector<4x2x100xbf16>
    %cst_94 = arith.constant 0.000000e+00 : bf16
    %177 = vector.broadcast %cst_94 : bf16 to vector<4x2x100xbf16>
    %178 = arith.maximumf %176, %177 : vector<4x2x100xbf16>
    %179 = vector.shape_cast %4 : vector<2x100xbf16> to vector<1x2x100xbf16>
    %180 = vector.broadcast %179 : vector<1x2x100xbf16> to vector<4x2x100xbf16>
    %181 = arith.mulf %178, %180 : vector<4x2x100xbf16>
    %182 = vector.shape_cast %9 : vector<2x100xbf16> to vector<1x2x100xbf16>
    %183 = vector.broadcast %182 : vector<1x2x100xbf16> to vector<4x2x100xbf16>
    %184 = arith.addf %181, %183 : vector<4x2x100xbf16>
    %cst_95 = arith.constant dense<0xFF80> : vector<2x100xbf16>
    %185 = vector.multi_reduction <maximumf>, %184, %cst_95 [0] : vector<4x2x100xbf16> to vector<2x100xbf16>
    %186 = arith.extf %185 : vector<2x100xbf16> to vector<2x100xf32>
    %c11 = arith.constant 11 : index
    %c0_96 = arith.constant 0 : index
    %c0_97 = arith.constant 0 : index
    %187 = vector.load %arg7[%c11, %c0_96, %c0_97] : memref<16x2x100xf32, #tpu.memory_space<vmem>>, vector<1x2x100xf32>
    %188 = vector.shape_cast %187 : vector<1x2x100xf32> to vector<2x100xf32>
    %189 = vector.shape_cast %186 : vector<2x100xf32> to vector<1x2x100xf32>
    tpu.vector_store %arg7[%c11, %c0_96, %c0_97], %189 {strides = array<i32>} : memref<16x2x100xf32, #tpu.memory_space<vmem>>, vector<1x2x100xf32>,
    %c48 = arith.constant 48 : index
    %c0_98 = arith.constant 0 : index
    %c0_99 = arith.constant 0 : index
    %190 = vector.load %arg1[%c48, %c0_98, %c0_99] : memref<64x2x100xbf16, #tpu.memory_space<vmem>>, vector<4x2x100xbf16>
    %cst_100 = arith.constant 0.000000e+00 : bf16
    %191 = vector.broadcast %cst_100 : bf16 to vector<4x2x100xbf16>
    %192 = arith.maximumf %190, %191 : vector<4x2x100xbf16>
    %193 = vector.shape_cast %4 : vector<2x100xbf16> to vector<1x2x100xbf16>
    %194 = vector.broadcast %193 : vector<1x2x100xbf16> to vector<4x2x100xbf16>
    %195 = arith.mulf %192, %194 : vector<4x2x100xbf16>
    %196 = vector.shape_cast %9 : vector<2x100xbf16> to vector<1x2x100xbf16>
    %197 = vector.broadcast %196 : vector<1x2x100xbf16> to vector<4x2x100xbf16>
    %198 = arith.addf %195, %197 : vector<4x2x100xbf16>
    %cst_101 = arith.constant dense<0xFF80> : vector<2x100xbf16>
    %199 = vector.multi_reduction <maximumf>, %198, %cst_101 [0] : vector<4x2x100xbf16> to vector<2x100xbf16>
    %200 = arith.extf %199 : vector<2x100xbf16> to vector<2x100xf32>
    %c12_102 = arith.constant 12 : index
    %c0_103 = arith.constant 0 : index
    %c0_104 = arith.constant 0 : index
    %201 = vector.load %arg7[%c12_102, %c0_103, %c0_104] : memref<16x2x100xf32, #tpu.memory_space<vmem>>, vector<1x2x100xf32>
    %202 = vector.shape_cast %201 : vector<1x2x100xf32> to vector<2x100xf32>
    %203 = vector.shape_cast %200 : vector<2x100xf32> to vector<1x2x100xf32>
    tpu.vector_store %arg7[%c12_102, %c0_103, %c0_104], %203 {strides = array<i32>} : memref<16x2x100xf32, #tpu.memory_space<vmem>>, vector<1x2x100xf32>,
    %c52 = arith.constant 52 : index
    %c0_105 = arith.constant 0 : index
    %c0_106 = arith.constant 0 : index
    %204 = vector.load %arg1[%c52, %c0_105, %c0_106] : memref<64x2x100xbf16, #tpu.memory_space<vmem>>, vector<4x2x100xbf16>
    %cst_107 = arith.constant 0.000000e+00 : bf16
    %205 = vector.broadcast %cst_107 : bf16 to vector<4x2x100xbf16>
    %206 = arith.maximumf %204, %205 : vector<4x2x100xbf16>
    %207 = vector.shape_cast %4 : vector<2x100xbf16> to vector<1x2x100xbf16>
    %208 = vector.broadcast %207 : vector<1x2x100xbf16> to vector<4x2x100xbf16>
    %209 = arith.mulf %206, %208 : vector<4x2x100xbf16>
    %210 = vector.shape_cast %9 : vector<2x100xbf16> to vector<1x2x100xbf16>
    %211 = vector.broadcast %210 : vector<1x2x100xbf16> to vector<4x2x100xbf16>
    %212 = arith.addf %209, %211 : vector<4x2x100xbf16>
    %cst_108 = arith.constant dense<0xFF80> : vector<2x100xbf16>
    %213 = vector.multi_reduction <maximumf>, %212, %cst_108 [0] : vector<4x2x100xbf16> to vector<2x100xbf16>
    %214 = arith.extf %213 : vector<2x100xbf16> to vector<2x100xf32>
    %c13 = arith.constant 13 : index
    %c0_109 = arith.constant 0 : index
    %c0_110 = arith.constant 0 : index
    %215 = vector.load %arg7[%c13, %c0_109, %c0_110] : memref<16x2x100xf32, #tpu.memory_space<vmem>>, vector<1x2x100xf32>
    %216 = vector.shape_cast %215 : vector<1x2x100xf32> to vector<2x100xf32>
    %217 = vector.shape_cast %214 : vector<2x100xf32> to vector<1x2x100xf32>
    tpu.vector_store %arg7[%c13, %c0_109, %c0_110], %217 {strides = array<i32>} : memref<16x2x100xf32, #tpu.memory_space<vmem>>, vector<1x2x100xf32>,
    %c56 = arith.constant 56 : index
    %c0_111 = arith.constant 0 : index
    %c0_112 = arith.constant 0 : index
    %218 = vector.load %arg1[%c56, %c0_111, %c0_112] : memref<64x2x100xbf16, #tpu.memory_space<vmem>>, vector<4x2x100xbf16>
    %cst_113 = arith.constant 0.000000e+00 : bf16
    %219 = vector.broadcast %cst_113 : bf16 to vector<4x2x100xbf16>
    %220 = arith.maximumf %218, %219 : vector<4x2x100xbf16>
    %221 = vector.shape_cast %4 : vector<2x100xbf16> to vector<1x2x100xbf16>
    %222 = vector.broadcast %221 : vector<1x2x100xbf16> to vector<4x2x100xbf16>
    %223 = arith.mulf %220, %222 : vector<4x2x100xbf16>
    %224 = vector.shape_cast %9 : vector<2x100xbf16> to vector<1x2x100xbf16>
    %225 = vector.broadcast %224 : vector<1x2x100xbf16> to vector<4x2x100xbf16>
    %226 = arith.addf %223, %225 : vector<4x2x100xbf16>
    %cst_114 = arith.constant dense<0xFF80> : vector<2x100xbf16>
    %227 = vector.multi_reduction <maximumf>, %226, %cst_114 [0] : vector<4x2x100xbf16> to vector<2x100xbf16>
    %228 = arith.extf %227 : vector<2x100xbf16> to vector<2x100xf32>
    %c14 = arith.constant 14 : index
    %c0_115 = arith.constant 0 : index
    %c0_116 = arith.constant 0 : index
    %229 = vector.load %arg7[%c14, %c0_115, %c0_116] : memref<16x2x100xf32, #tpu.memory_space<vmem>>, vector<1x2x100xf32>
    %230 = vector.shape_cast %229 : vector<1x2x100xf32> to vector<2x100xf32>
    %231 = vector.shape_cast %228 : vector<2x100xf32> to vector<1x2x100xf32>
    tpu.vector_store %arg7[%c14, %c0_115, %c0_116], %231 {strides = array<i32>} : memref<16x2x100xf32, #tpu.memory_space<vmem>>, vector<1x2x100xf32>,
    %c60 = arith.constant 60 : index
    %c0_117 = arith.constant 0 : index
    %c0_118 = arith.constant 0 : index
    %232 = vector.load %arg1[%c60, %c0_117, %c0_118] : memref<64x2x100xbf16, #tpu.memory_space<vmem>>, vector<4x2x100xbf16>
    %cst_119 = arith.constant 0.000000e+00 : bf16
    %233 = vector.broadcast %cst_119 : bf16 to vector<4x2x100xbf16>
    %234 = arith.maximumf %232, %233 : vector<4x2x100xbf16>
    %235 = vector.shape_cast %4 : vector<2x100xbf16> to vector<1x2x100xbf16>
    %236 = vector.broadcast %235 : vector<1x2x100xbf16> to vector<4x2x100xbf16>
    %237 = arith.mulf %234, %236 : vector<4x2x100xbf16>
    %238 = vector.shape_cast %9 : vector<2x100xbf16> to vector<1x2x100xbf16>
    %239 = vector.broadcast %238 : vector<1x2x100xbf16> to vector<4x2x100xbf16>
    %240 = arith.addf %237, %239 : vector<4x2x100xbf16>
    %cst_120 = arith.constant dense<0xFF80> : vector<2x100xbf16>
    %241 = vector.multi_reduction <maximumf>, %240, %cst_120 [0] : vector<4x2x100xbf16> to vector<2x100xbf16>
    %242 = arith.extf %241 : vector<2x100xbf16> to vector<2x100xf32>
    %c15 = arith.constant 15 : index
    %c0_121 = arith.constant 0 : index
    %c0_122 = arith.constant 0 : index
    %243 = vector.load %arg7[%c15, %c0_121, %c0_122] : memref<16x2x100xf32, #tpu.memory_space<vmem>>, vector<1x2x100xf32>
    %244 = vector.shape_cast %243 : vector<1x2x100xf32> to vector<2x100xf32>
    %245 = vector.shape_cast %242 : vector<2x100xf32> to vector<1x2x100xf32>
    tpu.vector_store %arg7[%c15, %c0_121, %c0_122], %245 {strides = array<i32>} : memref<16x2x100xf32, #tpu.memory_space<vmem>>, vector<1x2x100xf32>,
    %c0_123 = arith.constant 0 : index
    %c0_124 = arith.constant 0 : index
    %c0_125 = arith.constant 0 : index
    %246 = vector.load %arg7[%c0_123, %c0_124, %c0_125] : memref<16x2x100xf32, #tpu.memory_space<vmem>>, vector<2x2x100xf32>
    %cst_126 = arith.constant 0.000000e+00 : f32
    %247 = vector.broadcast %cst_126 : f32 to vector<2x2x100xf32>
    %248 = arith.maximumf %246, %247 : vector<2x2x100xf32>
    %249 = vector.shape_cast %11 : vector<1x100xf32> to vector<1x1x100xf32>
    %250 = vector.broadcast %249 : vector<1x1x100xf32> to vector<2x2x100xf32>
    %251 = arith.mulf %248, %250 : vector<2x2x100xf32>
    %252 = vector.shape_cast %13 : vector<1x100xf32> to vector<1x1x100xf32>
    %253 = vector.broadcast %252 : vector<1x1x100xf32> to vector<2x2x100xf32>
    %254 = arith.addf %251, %253 : vector<2x2x100xf32>
    %cst_127 = arith.constant dense<0xFF800000> : vector<2x100xf32>
    %255 = vector.multi_reduction <maximumf>, %254, %cst_127 [0] : vector<2x2x100xf32> to vector<2x100xf32>
    %c0_128 = arith.constant 0 : index
    %c0_129 = arith.constant 0 : index
    %c0_130 = arith.constant 0 : index
    %256 = vector.load %arg8[%c0_128, %c0_129, %c0_130] : memref<8x2x100xf32, #tpu.memory_space<vmem>>, vector<1x2x100xf32>
    %257 = vector.shape_cast %256 : vector<1x2x100xf32> to vector<2x100xf32>
    %258 = vector.shape_cast %255 : vector<2x100xf32> to vector<1x2x100xf32>
    tpu.vector_store %arg8[%c0_128, %c0_129, %c0_130], %258 {strides = array<i32>} : memref<8x2x100xf32, #tpu.memory_space<vmem>>, vector<1x2x100xf32>,
    %c2_131 = arith.constant 2 : index
    %c0_132 = arith.constant 0 : index
    %c0_133 = arith.constant 0 : index
    %259 = vector.load %arg7[%c2_131, %c0_132, %c0_133] : memref<16x2x100xf32, #tpu.memory_space<vmem>>, vector<2x2x100xf32>
    %cst_134 = arith.constant 0.000000e+00 : f32
    %260 = vector.broadcast %cst_134 : f32 to vector<2x2x100xf32>
    %261 = arith.maximumf %259, %260 : vector<2x2x100xf32>
    %262 = vector.shape_cast %11 : vector<1x100xf32> to vector<1x1x100xf32>
    %263 = vector.broadcast %262 : vector<1x1x100xf32> to vector<2x2x100xf32>
    %264 = arith.mulf %261, %263 : vector<2x2x100xf32>
    %265 = vector.shape_cast %13 : vector<1x100xf32> to vector<1x1x100xf32>
    %266 = vector.broadcast %265 : vector<1x1x100xf32> to vector<2x2x100xf32>
    %267 = arith.addf %264, %266 : vector<2x2x100xf32>
    %cst_135 = arith.constant dense<0xFF800000> : vector<2x100xf32>
    %268 = vector.multi_reduction <maximumf>, %267, %cst_135 [0] : vector<2x2x100xf32> to vector<2x100xf32>
    %c1_136 = arith.constant 1 : index
    %c0_137 = arith.constant 0 : index
    %c0_138 = arith.constant 0 : index
    %269 = vector.load %arg8[%c1_136, %c0_137, %c0_138] : memref<8x2x100xf32, #tpu.memory_space<vmem>>, vector<1x2x100xf32>
    %270 = vector.shape_cast %269 : vector<1x2x100xf32> to vector<2x100xf32>
    %271 = vector.shape_cast %268 : vector<2x100xf32> to vector<1x2x100xf32>
    tpu.vector_store %arg8[%c1_136, %c0_137, %c0_138], %271 {strides = array<i32>} : memref<8x2x100xf32, #tpu.memory_space<vmem>>, vector<1x2x100xf32>,
    %c4_139 = arith.constant 4 : index
    %c0_140 = arith.constant 0 : index
    %c0_141 = arith.constant 0 : index
    %272 = vector.load %arg7[%c4_139, %c0_140, %c0_141] : memref<16x2x100xf32, #tpu.memory_space<vmem>>, vector<2x2x100xf32>
    %cst_142 = arith.constant 0.000000e+00 : f32
    %273 = vector.broadcast %cst_142 : f32 to vector<2x2x100xf32>
    %274 = arith.maximumf %272, %273 : vector<2x2x100xf32>
    %275 = vector.shape_cast %11 : vector<1x100xf32> to vector<1x1x100xf32>
    %276 = vector.broadcast %275 : vector<1x1x100xf32> to vector<2x2x100xf32>
    %277 = arith.mulf %274, %276 : vector<2x2x100xf32>
    %278 = vector.shape_cast %13 : vector<1x100xf32> to vector<1x1x100xf32>
    %279 = vector.broadcast %278 : vector<1x1x100xf32> to vector<2x2x100xf32>
    %280 = arith.addf %277, %279 : vector<2x2x100xf32>
    %cst_143 = arith.constant dense<0xFF800000> : vector<2x100xf32>
    %281 = vector.multi_reduction <maximumf>, %280, %cst_143 [0] : vector<2x2x100xf32> to vector<2x100xf32>
    %c2_144 = arith.constant 2 : index
    %c0_145 = arith.constant 0 : index
    %c0_146 = arith.constant 0 : index
    %282 = vector.load %arg8[%c2_144, %c0_145, %c0_146] : memref<8x2x100xf32, #tpu.memory_space<vmem>>, vector<1x2x100xf32>
    %283 = vector.shape_cast %282 : vector<1x2x100xf32> to vector<2x100xf32>
    %284 = vector.shape_cast %281 : vector<2x100xf32> to vector<1x2x100xf32>
    tpu.vector_store %arg8[%c2_144, %c0_145, %c0_146], %284 {strides = array<i32>} : memref<8x2x100xf32, #tpu.memory_space<vmem>>, vector<1x2x100xf32>,
    %c6_147 = arith.constant 6 : index
    %c0_148 = arith.constant 0 : index
    %c0_149 = arith.constant 0 : index
    %285 = vector.load %arg7[%c6_147, %c0_148, %c0_149] : memref<16x2x100xf32, #tpu.memory_space<vmem>>, vector<2x2x100xf32>
    %cst_150 = arith.constant 0.000000e+00 : f32
    %286 = vector.broadcast %cst_150 : f32 to vector<2x2x100xf32>
    %287 = arith.maximumf %285, %286 : vector<2x2x100xf32>
    %288 = vector.shape_cast %11 : vector<1x100xf32> to vector<1x1x100xf32>
    %289 = vector.broadcast %288 : vector<1x1x100xf32> to vector<2x2x100xf32>
    %290 = arith.mulf %287, %289 : vector<2x2x100xf32>
    %291 = vector.shape_cast %13 : vector<1x100xf32> to vector<1x1x100xf32>
    %292 = vector.broadcast %291 : vector<1x1x100xf32> to vector<2x2x100xf32>
    %293 = arith.addf %290, %292 : vector<2x2x100xf32>
    %cst_151 = arith.constant dense<0xFF800000> : vector<2x100xf32>
    %294 = vector.multi_reduction <maximumf>, %293, %cst_151 [0] : vector<2x2x100xf32> to vector<2x100xf32>
    %c3_152 = arith.constant 3 : index
    %c0_153 = arith.constant 0 : index
    %c0_154 = arith.constant 0 : index
    %295 = vector.load %arg8[%c3_152, %c0_153, %c0_154] : memref<8x2x100xf32, #tpu.memory_space<vmem>>, vector<1x2x100xf32>
    %296 = vector.shape_cast %295 : vector<1x2x100xf32> to vector<2x100xf32>
    %297 = vector.shape_cast %294 : vector<2x100xf32> to vector<1x2x100xf32>
    tpu.vector_store %arg8[%c3_152, %c0_153, %c0_154], %297 {strides = array<i32>} : memref<8x2x100xf32, #tpu.memory_space<vmem>>, vector<1x2x100xf32>,
    %c8_155 = arith.constant 8 : index
    %c0_156 = arith.constant 0 : index
    %c0_157 = arith.constant 0 : index
    %298 = vector.load %arg7[%c8_155, %c0_156, %c0_157] : memref<16x2x100xf32, #tpu.memory_space<vmem>>, vector<2x2x100xf32>
    %cst_158 = arith.constant 0.000000e+00 : f32
    %299 = vector.broadcast %cst_158 : f32 to vector<2x2x100xf32>
    %300 = arith.maximumf %298, %299 : vector<2x2x100xf32>
    %301 = vector.shape_cast %11 : vector<1x100xf32> to vector<1x1x100xf32>
    %302 = vector.broadcast %301 : vector<1x1x100xf32> to vector<2x2x100xf32>
    %303 = arith.mulf %300, %302 : vector<2x2x100xf32>
    %304 = vector.shape_cast %13 : vector<1x100xf32> to vector<1x1x100xf32>
    %305 = vector.broadcast %304 : vector<1x1x100xf32> to vector<2x2x100xf32>
    %306 = arith.addf %303, %305 : vector<2x2x100xf32>
    %cst_159 = arith.constant dense<0xFF800000> : vector<2x100xf32>
    %307 = vector.multi_reduction <maximumf>, %306, %cst_159 [0] : vector<2x2x100xf32> to vector<2x100xf32>
    %c4_160 = arith.constant 4 : index
    %c0_161 = arith.constant 0 : index
    %c0_162 = arith.constant 0 : index
    %308 = vector.load %arg8[%c4_160, %c0_161, %c0_162] : memref<8x2x100xf32, #tpu.memory_space<vmem>>, vector<1x2x100xf32>
    %309 = vector.shape_cast %308 : vector<1x2x100xf32> to vector<2x100xf32>
    %310 = vector.shape_cast %307 : vector<2x100xf32> to vector<1x2x100xf32>
    tpu.vector_store %arg8[%c4_160, %c0_161, %c0_162], %310 {strides = array<i32>} : memref<8x2x100xf32, #tpu.memory_space<vmem>>, vector<1x2x100xf32>,
    %c10_163 = arith.constant 10 : index
    %c0_164 = arith.constant 0 : index
    %c0_165 = arith.constant 0 : index
    %311 = vector.load %arg7[%c10_163, %c0_164, %c0_165] : memref<16x2x100xf32, #tpu.memory_space<vmem>>, vector<2x2x100xf32>
    %cst_166 = arith.constant 0.000000e+00 : f32
    %312 = vector.broadcast %cst_166 : f32 to vector<2x2x100xf32>
    %313 = arith.maximumf %311, %312 : vector<2x2x100xf32>
    %314 = vector.shape_cast %11 : vector<1x100xf32> to vector<1x1x100xf32>
    %315 = vector.broadcast %314 : vector<1x1x100xf32> to vector<2x2x100xf32>
    %316 = arith.mulf %313, %315 : vector<2x2x100xf32>
    %317 = vector.shape_cast %13 : vector<1x100xf32> to vector<1x1x100xf32>
    %318 = vector.broadcast %317 : vector<1x1x100xf32> to vector<2x2x100xf32>
    %319 = arith.addf %316, %318 : vector<2x2x100xf32>
    %cst_167 = arith.constant dense<0xFF800000> : vector<2x100xf32>
    %320 = vector.multi_reduction <maximumf>, %319, %cst_167 [0] : vector<2x2x100xf32> to vector<2x100xf32>
    %c5_168 = arith.constant 5 : index
    %c0_169 = arith.constant 0 : index
    %c0_170 = arith.constant 0 : index
    %321 = vector.load %arg8[%c5_168, %c0_169, %c0_170] : memref<8x2x100xf32, #tpu.memory_space<vmem>>, vector<1x2x100xf32>
    %322 = vector.shape_cast %321 : vector<1x2x100xf32> to vector<2x100xf32>
    %323 = vector.shape_cast %320 : vector<2x100xf32> to vector<1x2x100xf32>
    tpu.vector_store %arg8[%c5_168, %c0_169, %c0_170], %323 {strides = array<i32>} : memref<8x2x100xf32, #tpu.memory_space<vmem>>, vector<1x2x100xf32>,
    %c12_171 = arith.constant 12 : index
    %c0_172 = arith.constant 0 : index
    %c0_173 = arith.constant 0 : index
    %324 = vector.load %arg7[%c12_171, %c0_172, %c0_173] : memref<16x2x100xf32, #tpu.memory_space<vmem>>, vector<2x2x100xf32>
    %cst_174 = arith.constant 0.000000e+00 : f32
    %325 = vector.broadcast %cst_174 : f32 to vector<2x2x100xf32>
    %326 = arith.maximumf %324, %325 : vector<2x2x100xf32>
    %327 = vector.shape_cast %11 : vector<1x100xf32> to vector<1x1x100xf32>
    %328 = vector.broadcast %327 : vector<1x1x100xf32> to vector<2x2x100xf32>
    %329 = arith.mulf %326, %328 : vector<2x2x100xf32>
    %330 = vector.shape_cast %13 : vector<1x100xf32> to vector<1x1x100xf32>
    %331 = vector.broadcast %330 : vector<1x1x100xf32> to vector<2x2x100xf32>
    %332 = arith.addf %329, %331 : vector<2x2x100xf32>
    %cst_175 = arith.constant dense<0xFF800000> : vector<2x100xf32>
    %333 = vector.multi_reduction <maximumf>, %332, %cst_175 [0] : vector<2x2x100xf32> to vector<2x100xf32>
    %c6_176 = arith.constant 6 : index
    %c0_177 = arith.constant 0 : index
    %c0_178 = arith.constant 0 : index
    %334 = vector.load %arg8[%c6_176, %c0_177, %c0_178] : memref<8x2x100xf32, #tpu.memory_space<vmem>>, vector<1x2x100xf32>
    %335 = vector.shape_cast %334 : vector<1x2x100xf32> to vector<2x100xf32>
    %336 = vector.shape_cast %333 : vector<2x100xf32> to vector<1x2x100xf32>
    tpu.vector_store %arg8[%c6_176, %c0_177, %c0_178], %336 {strides = array<i32>} : memref<8x2x100xf32, #tpu.memory_space<vmem>>, vector<1x2x100xf32>,
    %c14_179 = arith.constant 14 : index
    %c0_180 = arith.constant 0 : index
    %c0_181 = arith.constant 0 : index
    %337 = vector.load %arg7[%c14_179, %c0_180, %c0_181] : memref<16x2x100xf32, #tpu.memory_space<vmem>>, vector<2x2x100xf32>
    %cst_182 = arith.constant 0.000000e+00 : f32
    %338 = vector.broadcast %cst_182 : f32 to vector<2x2x100xf32>
    %339 = arith.maximumf %337, %338 : vector<2x2x100xf32>
    %340 = vector.shape_cast %11 : vector<1x100xf32> to vector<1x1x100xf32>
    %341 = vector.broadcast %340 : vector<1x1x100xf32> to vector<2x2x100xf32>
    %342 = arith.mulf %339, %341 : vector<2x2x100xf32>
    %343 = vector.shape_cast %13 : vector<1x100xf32> to vector<1x1x100xf32>
    %344 = vector.broadcast %343 : vector<1x1x100xf32> to vector<2x2x100xf32>
    %345 = arith.addf %342, %344 : vector<2x2x100xf32>
    %cst_183 = arith.constant dense<0xFF800000> : vector<2x100xf32>
    %346 = vector.multi_reduction <maximumf>, %345, %cst_183 [0] : vector<2x2x100xf32> to vector<2x100xf32>
    %c7_184 = arith.constant 7 : index
    %c0_185 = arith.constant 0 : index
    %c0_186 = arith.constant 0 : index
    %347 = vector.load %arg8[%c7_184, %c0_185, %c0_186] : memref<8x2x100xf32, #tpu.memory_space<vmem>>, vector<1x2x100xf32>
    %348 = vector.shape_cast %347 : vector<1x2x100xf32> to vector<2x100xf32>
    %349 = vector.shape_cast %346 : vector<2x100xf32> to vector<1x2x100xf32>
    tpu.vector_store %arg8[%c7_184, %c0_185, %c0_186], %349 {strides = array<i32>} : memref<8x2x100xf32, #tpu.memory_space<vmem>>, vector<1x2x100xf32>,
    %c0_187 = arith.constant 0 : index
    %c0_188 = arith.constant 0 : index
    %c0_189 = arith.constant 0 : index
    %350 = vector.load %arg8[%c0_187, %c0_188, %c0_189] : memref<8x2x100xf32, #tpu.memory_space<vmem>>, vector<2x2x100xf32>
    %cst_190 = arith.constant 0.000000e+00 : f32
    %351 = vector.broadcast %cst_190 : f32 to vector<2x2x100xf32>
    %352 = arith.maximumf %350, %351 : vector<2x2x100xf32>
    %353 = vector.shape_cast %15 : vector<1x100xf32> to vector<1x1x100xf32>
    %354 = vector.broadcast %353 : vector<1x1x100xf32> to vector<2x2x100xf32>
    %355 = arith.mulf %352, %354 : vector<2x2x100xf32>
    %356 = vector.shape_cast %17 : vector<1x100xf32> to vector<1x1x100xf32>
    %357 = vector.broadcast %356 : vector<1x1x100xf32> to vector<2x2x100xf32>
    %358 = arith.addf %355, %357 : vector<2x2x100xf32>
    %cst_191 = arith.constant dense<0xFF800000> : vector<2x100xf32>
    %359 = vector.multi_reduction <maximumf>, %358, %cst_191 [0] : vector<2x2x100xf32> to vector<2x100xf32>
    %c0_192 = arith.constant 0 : index
    %c0_193 = arith.constant 0 : index
    %c0_194 = arith.constant 0 : index
    %360 = vector.load %arg7[%c0_192, %c0_193, %c0_194] : memref<16x2x100xf32, #tpu.memory_space<vmem>>, vector<1x2x100xf32>
    %361 = vector.shape_cast %360 : vector<1x2x100xf32> to vector<2x100xf32>
    %362 = vector.shape_cast %359 : vector<2x100xf32> to vector<1x2x100xf32>
    tpu.vector_store %arg7[%c0_192, %c0_193, %c0_194], %362 {strides = array<i32>} : memref<16x2x100xf32, #tpu.memory_space<vmem>>, vector<1x2x100xf32>,
    %c2_195 = arith.constant 2 : index
    %c0_196 = arith.constant 0 : index
    %c0_197 = arith.constant 0 : index
    %363 = vector.load %arg8[%c2_195, %c0_196, %c0_197] : memref<8x2x100xf32, #tpu.memory_space<vmem>>, vector<2x2x100xf32>
    %cst_198 = arith.constant 0.000000e+00 : f32
    %364 = vector.broadcast %cst_198 : f32 to vector<2x2x100xf32>
    %365 = arith.maximumf %363, %364 : vector<2x2x100xf32>
    %366 = vector.shape_cast %15 : vector<1x100xf32> to vector<1x1x100xf32>
    %367 = vector.broadcast %366 : vector<1x1x100xf32> to vector<2x2x100xf32>
    %368 = arith.mulf %365, %367 : vector<2x2x100xf32>
    %369 = vector.shape_cast %17 : vector<1x100xf32> to vector<1x1x100xf32>
    %370 = vector.broadcast %369 : vector<1x1x100xf32> to vector<2x2x100xf32>
    %371 = arith.addf %368, %370 : vector<2x2x100xf32>
    %cst_199 = arith.constant dense<0xFF800000> : vector<2x100xf32>
    %372 = vector.multi_reduction <maximumf>, %371, %cst_199 [0] : vector<2x2x100xf32> to vector<2x100xf32>
    %c1_200 = arith.constant 1 : index
    %c0_201 = arith.constant 0 : index
    %c0_202 = arith.constant 0 : index
    %373 = vector.load %arg7[%c1_200, %c0_201, %c0_202] : memref<16x2x100xf32, #tpu.memory_space<vmem>>, vector<1x2x100xf32>
    %374 = vector.shape_cast %373 : vector<1x2x100xf32> to vector<2x100xf32>
    %375 = vector.shape_cast %372 : vector<2x100xf32> to vector<1x2x100xf32>
    tpu.vector_store %arg7[%c1_200, %c0_201, %c0_202], %375 {strides = array<i32>} : memref<16x2x100xf32, #tpu.memory_space<vmem>>, vector<1x2x100xf32>,
    %c4_203 = arith.constant 4 : index
    %c0_204 = arith.constant 0 : index
    %c0_205 = arith.constant 0 : index
    %376 = vector.load %arg8[%c4_203, %c0_204, %c0_205] : memref<8x2x100xf32, #tpu.memory_space<vmem>>, vector<2x2x100xf32>
    %cst_206 = arith.constant 0.000000e+00 : f32
    %377 = vector.broadcast %cst_206 : f32 to vector<2x2x100xf32>
    %378 = arith.maximumf %376, %377 : vector<2x2x100xf32>
    %379 = vector.shape_cast %15 : vector<1x100xf32> to vector<1x1x100xf32>
    %380 = vector.broadcast %379 : vector<1x1x100xf32> to vector<2x2x100xf32>
    %381 = arith.mulf %378, %380 : vector<2x2x100xf32>
    %382 = vector.shape_cast %17 : vector<1x100xf32> to vector<1x1x100xf32>
    %383 = vector.broadcast %382 : vector<1x1x100xf32> to vector<2x2x100xf32>
    %384 = arith.addf %381, %383 : vector<2x2x100xf32>
    %cst_207 = arith.constant dense<0xFF800000> : vector<2x100xf32>
    %385 = vector.multi_reduction <maximumf>, %384, %cst_207 [0] : vector<2x2x100xf32> to vector<2x100xf32>
    %c2_208 = arith.constant 2 : index
    %c0_209 = arith.constant 0 : index
    %c0_210 = arith.constant 0 : index
    %386 = vector.load %arg7[%c2_208, %c0_209, %c0_210] : memref<16x2x100xf32, #tpu.memory_space<vmem>>, vector<1x2x100xf32>
    %387 = vector.shape_cast %386 : vector<1x2x100xf32> to vector<2x100xf32>
    %388 = vector.shape_cast %385 : vector<2x100xf32> to vector<1x2x100xf32>
    tpu.vector_store %arg7[%c2_208, %c0_209, %c0_210], %388 {strides = array<i32>} : memref<16x2x100xf32, #tpu.memory_space<vmem>>, vector<1x2x100xf32>,
    %c6_211 = arith.constant 6 : index
    %c0_212 = arith.constant 0 : index
    %c0_213 = arith.constant 0 : index
    %389 = vector.load %arg8[%c6_211, %c0_212, %c0_213] : memref<8x2x100xf32, #tpu.memory_space<vmem>>, vector<2x2x100xf32>
    %cst_214 = arith.constant 0.000000e+00 : f32
    %390 = vector.broadcast %cst_214 : f32 to vector<2x2x100xf32>
    %391 = arith.maximumf %389, %390 : vector<2x2x100xf32>
    %392 = vector.shape_cast %15 : vector<1x100xf32> to vector<1x1x100xf32>
    %393 = vector.broadcast %392 : vector<1x1x100xf32> to vector<2x2x100xf32>
    %394 = arith.mulf %391, %393 : vector<2x2x100xf32>
    %395 = vector.shape_cast %17 : vector<1x100xf32> to vector<1x1x100xf32>
    %396 = vector.broadcast %395 : vector<1x1x100xf32> to vector<2x2x100xf32>
    %397 = arith.addf %394, %396 : vector<2x2x100xf32>
    %cst_215 = arith.constant dense<0xFF800000> : vector<2x100xf32>
    %398 = vector.multi_reduction <maximumf>, %397, %cst_215 [0] : vector<2x2x100xf32> to vector<2x100xf32>
    %c3_216 = arith.constant 3 : index
    %c0_217 = arith.constant 0 : index
    %c0_218 = arith.constant 0 : index
    %399 = vector.load %arg7[%c3_216, %c0_217, %c0_218] : memref<16x2x100xf32, #tpu.memory_space<vmem>>, vector<1x2x100xf32>
    %400 = vector.shape_cast %399 : vector<1x2x100xf32> to vector<2x100xf32>
    %401 = vector.shape_cast %398 : vector<2x100xf32> to vector<1x2x100xf32>
    tpu.vector_store %arg7[%c3_216, %c0_217, %c0_218], %401 {strides = array<i32>} : memref<16x2x100xf32, #tpu.memory_space<vmem>>, vector<1x2x100xf32>,
    %c0_219 = arith.constant 0 : index
    %c0_220 = arith.constant 0 : index
    %c0_221 = arith.constant 0 : index
    %402 = vector.load %arg7[%c0_219, %c0_220, %c0_221] : memref<16x2x100xf32, #tpu.memory_space<vmem>>, vector<2x2x100xf32>
    %cst_222 = arith.constant 0.000000e+00 : f32
    %403 = vector.broadcast %cst_222 : f32 to vector<2x2x100xf32>
    %404 = arith.maximumf %402, %403 : vector<2x2x100xf32>
    %405 = vector.shape_cast %19 : vector<1x100xf32> to vector<1x1x100xf32>
    %406 = vector.broadcast %405 : vector<1x1x100xf32> to vector<2x2x100xf32>
    %407 = arith.mulf %404, %406 : vector<2x2x100xf32>
    %408 = vector.shape_cast %21 : vector<1x100xf32> to vector<1x1x100xf32>
    %409 = vector.broadcast %408 : vector<1x1x100xf32> to vector<2x2x100xf32>
    %410 = arith.addf %407, %409 : vector<2x2x100xf32>
    %cst_223 = arith.constant dense<0xFF800000> : vector<2x100xf32>
    %411 = vector.multi_reduction <maximumf>, %410, %cst_223 [0] : vector<2x2x100xf32> to vector<2x100xf32>
    %c2_224 = arith.constant 2 : index
    %c0_225 = arith.constant 0 : index
    %c0_226 = arith.constant 0 : index
    %412 = vector.load %arg7[%c2_224, %c0_225, %c0_226] : memref<16x2x100xf32, #tpu.memory_space<vmem>>, vector<2x2x100xf32>
    %cst_227 = arith.constant 0.000000e+00 : f32
    %413 = vector.broadcast %cst_227 : f32 to vector<2x2x100xf32>
    %414 = arith.maximumf %412, %413 : vector<2x2x100xf32>
    %415 = vector.shape_cast %19 : vector<1x100xf32> to vector<1x1x100xf32>
    %416 = vector.broadcast %415 : vector<1x1x100xf32> to vector<2x2x100xf32>
    %417 = arith.mulf %414, %416 : vector<2x2x100xf32>
    %418 = vector.shape_cast %21 : vector<1x100xf32> to vector<1x1x100xf32>
    %419 = vector.broadcast %418 : vector<1x1x100xf32> to vector<2x2x100xf32>
    %420 = arith.addf %417, %419 : vector<2x2x100xf32>
    %cst_228 = arith.constant dense<0xFF800000> : vector<2x100xf32>
    %421 = vector.multi_reduction <maximumf>, %420, %cst_228 [0] : vector<2x2x100xf32> to vector<2x100xf32>
    %c0_229 = arith.constant 0 : index
    %c0_230 = arith.constant 0 : index
    %c0_231 = arith.constant 0 : index
    %422 = vector.load %arg4[%c0_229, %c0_230, %c0_231] : memref<2x100x128xf32, #tpu.memory_space<vmem>>, vector<1x100x128xf32>
    %423 = vector.shape_cast %422 : vector<1x100x128xf32> to vector<100x128xf32>
    %cst_232 = arith.constant dense<0.000000e+00> : vector<2x128xf32>
    %424 = tpu.matmul %411, %423, %cst_232 {dimension_numbers = #tpu.dot_dimension_numbers<[1], [0], [0], [1], [0, 0, 1, 1], [], []>} : vector<2x100xf32>, vector<100x128xf32>, vector<2x128xf32> -> vector<2x128xf32>
    %c1_233 = arith.constant 1 : index
    %c0_234 = arith.constant 0 : index
    %c0_235 = arith.constant 0 : index
    %425 = vector.load %arg4[%c1_233, %c0_234, %c0_235] : memref<2x100x128xf32, #tpu.memory_space<vmem>>, vector<1x100x128xf32>
    %426 = vector.shape_cast %425 : vector<1x100x128xf32> to vector<100x128xf32>
    %cst_236 = arith.constant dense<0.000000e+00> : vector<2x128xf32>
    %427 = tpu.matmul %421, %426, %cst_236 {dimension_numbers = #tpu.dot_dimension_numbers<[1], [0], [0], [1], [0, 0, 1, 1], [], []>} : vector<2x100xf32>, vector<100x128xf32>, vector<2x128xf32> -> vector<2x128xf32>
    %428 = arith.addf %424, %427 : vector<2x128xf32>
    %c0_237 = arith.constant 0 : index
    %c0_238 = arith.constant 0 : index
    %429 = vector.load %arg5[%c0_237, %c0_238] : memref<1x128xf32, #tpu.memory_space<vmem>>, vector<1x128xf32>
    %430 = vector.broadcast %429 : vector<1x128xf32> to vector<2x128xf32>
    %431 = arith.addf %428, %430 : vector<2x128xf32>
    %c0_239 = arith.constant 0 : index
    %c0_240 = arith.constant 0 : index
    %432 = vector.load %arg6[%c0_239, %c0_240] : memref<2x128xf32, #tpu.memory_space<vmem>>, vector<2x128xf32>
    tpu.vector_store %arg6[%c0_239, %c0_240], %431 {strides = array<i32>} : memref<2x128xf32, #tpu.memory_space<vmem>>, vector<2x128xf32>,
    return
  }
  func.func @transform_0(%arg0: i32) -> (i32, i32, i32) {
    %c0_i32 = arith.constant 0 : i32
    %c0_i32_0 = arith.constant 0 : i32
    %c0_i32_1 = arith.constant 0 : i32
    return %c0_i32, %arg0, %c0_i32_0 : i32, i32, i32
  }
  func.func @transform_1(%arg0: i32) -> (i32, i32, i32) {
    %c0_i32 = arith.constant 0 : i32
    %c0_i32_0 = arith.constant 0 : i32
    %c0_i32_1 = arith.constant 0 : i32
    %c0_i32_2 = arith.constant 0 : i32
    return %c0_i32, %c0_i32_0, %c0_i32_1 : i32, i32, i32
  }
  func.func @transform_2(%arg0: i32) -> (i32, i32, i32) {
    %c0_i32 = arith.constant 0 : i32
    %c0_i32_0 = arith.constant 0 : i32
    %c0_i32_1 = arith.constant 0 : i32
    %c0_i32_2 = arith.constant 0 : i32
    return %c0_i32, %c0_i32_0, %c0_i32_1 : i32, i32, i32
  }
  func.func @transform_3(%arg0: i32) -> (i32, i32, i32) {
    %c0_i32 = arith.constant 0 : i32
    %c0_i32_0 = arith.constant 0 : i32
    %c0_i32_1 = arith.constant 0 : i32
    %c0_i32_2 = arith.constant 0 : i32
    return %c0_i32, %c0_i32_0, %c0_i32_1 : i32, i32, i32
  }
  func.func @transform_4(%arg0: i32) -> (i32, i32) {
    %c0_i32 = arith.constant 0 : i32
    %c0_i32_0 = arith.constant 0 : i32
    %c0_i32_1 = arith.constant 0 : i32
    return %c0_i32, %c0_i32_0 : i32, i32
  }
  func.func @transform_5(%arg0: i32) -> (i32, i32) {
    %c0_i32 = arith.constant 0 : i32
    %c0_i32_0 = arith.constant 0 : i32
    return %arg0, %c0_i32 : i32, i32
  }
}

</mosaic_0001>

<llo_original>
// kernel: encoder_net.1
$region0: #{encoder_net.1}
  #allocation0 [shape = 'u32[]', space=smem, size = 0x4, offset = 0x4, fixed_abs, tag = 'smem constant byte address 0x4 - core index']
  #allocation1 [shape = 'u32[72,128]{1,0:T(1,128)}', space=vmem, size = 0x9000, scoped, tag = 'internal scratch']
  #allocation2 [shape = 'f32[16,2,100]{2,1,0:T(2,128)}', space=vmem, size = 0x4000, scoped, tag = 'scratch operand']
  #allocation3 [shape = 'f32[8,2,100]{2,1,0:T(2,128)}', space=vmem, size = 0x2000, scoped, tag = 'scratch operand']
  %s0 = inlined_call_operand.vmem [shape: bf16[64,2,100], index: 0, kind: input, shape index: {}]
  %s1 = inlined_call_operand.vmem [shape: f32[4,1,100], index: 1, kind: input, shape index: {}]
  %s2 = inlined_call_operand.vmem [shape: f32[4,1,100], index: 2, kind: input, shape index: {}]
  %s3 = inlined_call_operand.vmem [shape: f32[2,100,128], index: 3, kind: input, shape index: {}]
  %s4 = inlined_call_operand.vmem [shape: f32[1,128], index: 4, kind: input, shape index: {}]
  %s5 = inlined_call_operand.hbm [shape: f32[2,128], index: 5, kind: output, shape index: {}]
  %s6 = sld [smem:[#allocation0]]
  $region30: #{encoder_net.1} parent=0
    _
  %s8 = ssub.s32 1, %s6
  %s9 = scalar_select 0, %s8, %s6
  $region1: #{encoder_net.1} parent=0
    #allocation4 [shape = 'u8[1024]{0}', space=vmem, size = 0x400, scoped, tag = 'output window, operand 0, single buffered']
    #allocation5 [shape = 's32[1]{0}', space=sflag, size = 0x4, scoped, tag = 'scoped memory for encoder_net.1']
    %10 = vsyncpa [#allocation5], 0
    // Predicated region
    $region2: #{encoder_net.1} parent=1 // pred_check
      _
    $region3: #{encoder_net.1} parent=1 // pred_check_branch
      %12 = sbr.rel (0) target = $region5
    $region4: #{encoder_net.1} parent=1 // pred_region
      _
    $region5: #{encoder_net.1} parent=1 // pred_fallthru
      _
    // Predicated region
    $region6: #{encoder_net.1} parent=1 // pred_check
      _
    $region7: #{encoder_net.1} parent=1 // pred_check_branch
      %14 = sbr.rel (0) target = $region9
    $region8: #{encoder_net.1} parent=1 // pred_region
      _
    $region9: #{encoder_net.1} parent=1 // pred_fallthru
      _
    // Predicated region
    $region10: #{encoder_net.1} parent=1 // pred_check
      _
    $region11: #{encoder_net.1} parent=1 // pred_check_branch
      %16 = sbr.rel (0) target = $region13
    $region12: #{encoder_net.1} parent=1 // pred_region
      _
    $region13: #{encoder_net.1} parent=1 // pred_fallthru
      _
    // Predicated region
    $region14: #{encoder_net.1} parent=1 // pred_check
      _
    $region15: #{encoder_net.1} parent=1 // pred_check_branch
      %18 = sbr.rel (0) target = $region17
    $region16: #{encoder_net.1} parent=1 // pred_region
      _
    $region17: #{encoder_net.1} parent=1 // pred_fallthru
      _
    // Predicated region
    $region18: #{encoder_net.1} parent=1 // pred_check
      _
    $region19: #{encoder_net.1} parent=1 // pred_check_branch
      %20 = sbr.rel (0) target = $region21
    $region20: #{encoder_net.1} parent=1 // pred_region
      _
    $region21: #{encoder_net.1} parent=1 // pred_fallthru
      _
    %v21 = vld [vmem:[%s1] sm:$0x1]
    %v22 = vpack.c.bf16 %v21, %v21
    %v23 = vld [vmem:[%s2] sm:$0x1]
    %v24 = vpack.c.bf16 %v23, %v23
    %s25 = scalar_lea.vmem %s1, 1
    %v26 = vld [vmem:[%s25] sm:$0x1]
    %s27 = scalar_lea.vmem %s2, 1
    %v28 = vld [vmem:[%s27] sm:$0x1]
    %s29 = scalar_lea.vmem %s1, 2
    %v30 = vld [vmem:[%s29] sm:$0x1]
    %s31 = scalar_lea.vmem %s2, 2
    %v32 = vld [vmem:[%s31] sm:$0x1]
    %s33 = scalar_lea.vmem %s1, 3
    %v34 = vld [vmem:[%s33] sm:$0x1]
    %s35 = scalar_lea.vmem %s2, 3
    %v36 = vld [vmem:[%s35] sm:$0x1]
    %v37 = vld [vmem:[%s0] sm:$0x1]
    %v38 = vld [vmem:[%s0 + $0x1] sm:$0x1]
    %v39 = vld [vmem:[%s0 + $0x2] sm:$0x1]
    %v40 = vld [vmem:[%s0 + $0x3] sm:$0x1]
    %v41 = vunpack.c.l.bf16 %v37
    %v42 = vunpack.c.l.bf16 %v38
    %v43 = vunpack.c.l.bf16 %v39
    %v44 = vunpack.c.l.bf16 %v40
    %v45 = vmax.f32 %v41, 0.0
    %v46 = vmax.f32 %v42, 0.0
    %v47 = vmax.f32 %v43, 0.0
    %v48 = vmax.f32 %v44, 0.0
    %v49 = vpack.c.bf16 %v45, %v45
    %v50 = vpack.c.bf16 %v46, %v46
    %v51 = vpack.c.bf16 %v47, %v47
    %v52 = vpack.c.bf16 %v48, %v48
    %v54 = vpack.i.b16 %v22, %v22
    %v56 = vperm.slane %v54, 0
    %v57 = vunpack.c.l.bf16 %v49
    %v58 = vunpack.c.l.bf16 %v50
    %v59 = vunpack.c.l.bf16 %v51
    %v60 = vunpack.c.l.bf16 %v52
    %v61 = vunpack.c.l.bf16 %v56
    %v62 = vmul.f32 %v57, %v61
    %v63 = vmul.f32 %v58, %v61
    %v64 = vmul.f32 %v59, %v61
    %v65 = vmul.f32 %v60, %v61
    %v66 = vpack.c.bf16 %v62, %v62
    %v67 = vpack.c.bf16 %v63, %v63
    %v68 = vpack.c.bf16 %v64, %v64
    %v69 = vpack.c.bf16 %v65, %v65
    %v71 = vpack.i.b16 %v24, %v24
    %v73 = vperm.slane %v71, 0
    %v74 = vunpack.c.l.bf16 %v66
    %v75 = vunpack.c.l.bf16 %v67
    %v76 = vunpack.c.l.bf16 %v68
    %v77 = vunpack.c.l.bf16 %v69
    %v78 = vunpack.c.l.bf16 %v73
    %v79 = vadd.f32 %v74, %v78
    %v80 = vadd.f32 %v75, %v78
    %v81 = vadd.f32 %v76, %v78
    %v82 = vadd.f32 %v77, %v78
    %v83 = vpack.c.bf16 %v79, %v79
    %v84 = vpack.c.bf16 %v80, %v80
    %v85 = vpack.c.bf16 %v81, %v81
    %v86 = vpack.c.bf16 %v82, %v82
    %v87 = vunpack.c.l.bf16 %v83
    %v88 = vunpack.c.l.bf16 %v84
    %v89 = vunpack.c.l.bf16 %v85
    %v90 = vunpack.c.l.bf16 %v86
    %vm91 = vcmask 812032
    %v92 = vsel %vm91, %v87, -inf
    %v93 = vsel %vm91, %v88, -inf
    %v94 = vsel %vm91, %v89, -inf
    %v95 = vsel %vm91, %v90, -inf
    %v96 = vmax.f32 %v92, %v93
    %v97 = vmax.f32 %v94, %v95
    %v98 = vmax.f32 %v96, %v97
    %v99 = vpack.c.bf16 %v98, %v98
    %v100 = vunpack.c.l.bf16 %v99
    %101 = vst.msk [vmem:[#allocation2] sm:$0x3] %vm91, %v100
    %s102 = scalar_lea.vmem %s0, 4
    %v103 = vld [vmem:[%s102] sm:$0x1]
    %v104 = vld [vmem:[%s102 + $0x1] sm:$0x1]
    %v105 = vld [vmem:[%s102 + $0x2] sm:$0x1]
    %v106 = vld [vmem:[%s102 + $0x3] sm:$0x1]
    %v107 = vunpack.c.l.bf16 %v103
    %v108 = vunpack.c.l.bf16 %v104
    %v109 = vunpack.c.l.bf16 %v105
    %v110 = vunpack.c.l.bf16 %v106
    %v111 = vmax.f32 %v107, 0.0
    %v112 = vmax.f32 %v108, 0.0
    %v113 = vmax.f32 %v109, 0.0
    %v114 = vmax.f32 %v110, 0.0
    %v115 = vpack.c.bf16 %v111, %v111
    %v116 = vpack.c.bf16 %v112, %v112
    %v117 = vpack.c.bf16 %v113, %v113
    %v118 = vpack.c.bf16 %v114, %v114
    %v119 = vunpack.c.l.bf16 %v115
    %v120 = vunpack.c.l.bf16 %v116
    %v121 = vunpack.c.l.bf16 %v117
    %v122 = vunpack.c.l.bf16 %v118
    %v123 = vmul.f32 %v119, %v61
    %v124 = vmul.f32 %v120, %v61
    %v125 = vmul.f32 %v121, %v61
    %v126 = vmul.f32 %v122, %v61
    %v127 = vpack.c.bf16 %v123, %v123
    %v128 = vpack.c.bf16 %v124, %v124
    %v129 = vpack.c.bf16 %v125, %v125
    %v130 = vpack.c.bf16 %v126, %v126
    %v131 = vunpack.c.l.bf16 %v127
    %v132 = vunpack.c.l.bf16 %v128
    %v133 = vunpack.c.l.bf16 %v129
    %v134 = vunpack.c.l.bf16 %v130
    %v135 = vadd.f32 %v131, %v78
    %v136 = vadd.f32 %v132, %v78
    %v137 = vadd.f32 %v133, %v78
    %v138 = vadd.f32 %v134, %v78
    %v139 = vpack.c.bf16 %v135, %v135
    %v140 = vpack.c.bf16 %v136, %v136
    %v141 = vpack.c.bf16 %v137, %v137
    %v142 = vpack.c.bf16 %v138, %v138
    %v143 = vunpack.c.l.bf16 %v139
    %v144 = vunpack.c.l.bf16 %v140
    %v145 = vunpack.c.l.bf16 %v141
    %v146 = vunpack.c.l.bf16 %v142
    %v147 = vsel %vm91, %v143, -inf
    %v148 = vsel %vm91, %v144, -inf
    %v149 = vsel %vm91, %v145, -inf
    %v150 = vsel %vm91, %v146, -inf
    %v151 = vmax.f32 %v147, %v148
    %v152 = vmax.f32 %v149, %v150
    %v153 = vmax.f32 %v151, %v152
    %v154 = vpack.c.bf16 %v153, %v153
    %v155 = vunpack.c.l.bf16 %v154
    %s156 = scalar_lea.vmem [#allocation2], 2
    %157 = vst.msk [vmem:[%s156] sm:$0x3] %vm91, %v155
    %s158 = scalar_lea.vmem %s0, 8
    %v159 = vld [vmem:[%s158] sm:$0x1]
    %v160 = vld [vmem:[%s158 + $0x1] sm:$0x1]
    %v161 = vld [vmem:[%s158 + $0x2] sm:$0x1]
    %v162 = vld [vmem:[%s158 + $0x3] sm:$0x1]
    %v163 = vunpack.c.l.bf16 %v159
    %v164 = vunpack.c.l.bf16 %v160
    %v165 = vunpack.c.l.bf16 %v161
    %v166 = vunpack.c.l.bf16 %v162
    %v167 = vmax.f32 %v163, 0.0
    %v168 = vmax.f32 %v164, 0.0
    %v169 = vmax.f32 %v165, 0.0
    %v170 = vmax.f32 %v166, 0.0
    %v171 = vpack.c.bf16 %v167, %v167
    %v172 = vpack.c.bf16 %v168, %v168
    %v173 = vpack.c.bf16 %v169, %v169
    %v174 = vpack.c.bf16 %v170, %v170
    %v175 = vunpack.c.l.bf16 %v171
    %v176 = vunpack.c.l.bf16 %v172
    %v177 = vunpack.c.l.bf16 %v173
    %v178 = vunpack.c.l.bf16 %v174
    %v179 = vmul.f32 %v175, %v61
    %v180 = vmul.f32 %v176, %v61
    %v181 = vmul.f32 %v177, %v61
    %v182 = vmul.f32 %v178, %v61
    %v183 = vpack.c.bf16 %v179, %v179
    %v184 = vpack.c.bf16 %v180, %v180
    %v185 = vpack.c.bf16 %v181, %v181
    %v186 = vpack.c.bf16 %v182, %v182
    %v187 = vunpack.c.l.bf16 %v183
    %v188 = vunpack.c.l.bf16 %v184
    %v189 = vunpack.c.l.bf16 %v185
    %v190 = vunpack.c.l.bf16 %v186
    %v191 = vadd.f32 %v187, %v78
    %v192 = vadd.f32 %v188, %v78
    %v193 = vadd.f32 %v189, %v78
    %v194 = vadd.f32 %v190, %v78
    %v195 = vpack.c.bf16 %v191, %v191
    %v196 = vpack.c.bf16 %v192, %v192
    %v197 = vpack.c.bf16 %v193, %v193
    %v198 = vpack.c.bf16 %v194, %v194
    %v199 = vunpack.c.l.bf16 %v195
    %v200 = vunpack.c.l.bf16 %v196
    %v201 = vunpack.c.l.bf16 %v197
    %v202 = vunpack.c.l.bf16 %v198
    %v203 = vsel %vm91, %v199, -inf
    %v204 = vsel %vm91, %v200, -inf
    %v205 = vsel %vm91, %v201, -inf
    %v206 = vsel %vm91, %v202, -inf
    %v207 = vmax.f32 %v203, %v204
    %v208 = vmax.f32 %v205, %v206
    %v209 = vmax.f32 %v207, %v208
    %v210 = vpack.c.bf16 %v209, %v209
    %v211 = vunpack.c.l.bf16 %v210
    %s212 = scalar_lea.vmem [#allocation2], 4
    %213 = vst.msk [vmem:[%s212] sm:$0x3] %vm91, %v211
    %s214 = scalar_lea.vmem %s0, 12
    %v215 = vld [vmem:[%s214] sm:$0x1]
    %v216 = vld [vmem:[%s214 + $0x1] sm:$0x1]
    %v217 = vld [vmem:[%s214 + $0x2] sm:$0x1]
    %v218 = vld [vmem:[%s214 + $0x3] sm:$0x1]
    %v219 = vunpack.c.l.bf16 %v215
    %v220 = vunpack.c.l.bf16 %v216
    %v221 = vunpack.c.l.bf16 %v217
    %v222 = vunpack.c.l.bf16 %v218
    %v223 = vmax.f32 %v219, 0.0
    %v224 = vmax.f32 %v220, 0.0
    %v225 = vmax.f32 %v221, 0.0
    %v226 = vmax.f32 %v222, 0.0
    %v227 = vpack.c.bf16 %v223, %v223
    %v228 = vpack.c.bf16 %v224, %v224
    %v229 = vpack.c.bf16 %v225, %v225
    %v230 = vpack.c.bf16 %v226, %v226
    %v231 = vunpack.c.l.bf16 %v227
    %v232 = vunpack.c.l.bf16 %v228
    %v233 = vunpack.c.l.bf16 %v229
    %v234 = vunpack.c.l.bf16 %v230
    %v235 = vmul.f32 %v231, %v61
    %v236 = vmul.f32 %v232, %v61
    %v237 = vmul.f32 %v233, %v61
    %v238 = vmul.f32 %v234, %v61
    %v239 = vpack.c.bf16 %v235, %v235
    %v240 = vpack.c.bf16 %v236, %v236
    %v241 = vpack.c.bf16 %v237, %v237
    %v242 = vpack.c.bf16 %v238, %v238
    %v243 = vunpack.c.l.bf16 %v239
    %v244 = vunpack.c.l.bf16 %v240
    %v245 = vunpack.c.l.bf16 %v241
    %v246 = vunpack.c.l.bf16 %v242
    %v247 = vadd.f32 %v243, %v78
    %v248 = vadd.f32 %v244, %v78
    %v249 = vadd.f32 %v245, %v78
    %v250 = vadd.f32 %v246, %v78
    %v251 = vpack.c.bf16 %v247, %v247
    %v252 = vpack.c.bf16 %v248, %v248
    %v253 = vpack.c.bf16 %v249, %v249
    %v254 = vpack.c.bf16 %v250, %v250
    %v255 = vunpack.c.l.bf16 %v251
    %v256 = vunpack.c.l.bf16 %v252
    %v257 = vunpack.c.l.bf16 %v253
    %v258 = vunpack.c.l.bf16 %v254
    %v259 = vsel %vm91, %v255, -inf
    %v260 = vsel %vm91, %v256, -inf
    %v261 = vsel %vm91, %v257, -inf
    %v262 = vsel %vm91, %v258, -inf
    %v263 = vmax.f32 %v259, %v260
    %v264 = vmax.f32 %v261, %v262
    %v265 = vmax.f32 %v263, %v264
    %v266 = vpack.c.bf16 %v265, %v265
    %v267 = vunpack.c.l.bf16 %v266
    %s268 = scalar_lea.vmem [#allocation2], 6
    %269 = vst.msk [vmem:[%s268] sm:$0x3] %vm91, %v267
    %s270 = scalar_lea.vmem %s0, 16
    %v271 = vld [vmem:[%s270] sm:$0x1]
    %v272 = vld [vmem:[%s270 + $0x1] sm:$0x1]
    %v273 = vld [vmem:[%s270 + $0x2] sm:$0x1]
    %v274 = vld [vmem:[%s270 + $0x3] sm:$0x1]
    %v275 = vunpack.c.l.bf16 %v271
    %v276 = vunpack.c.l.bf16 %v272
    %v277 = vunpack.c.l.bf16 %v273
    %v278 = vunpack.c.l.bf16 %v274
    %v279 = vmax.f32 %v275, 0.0
    %v280 = vmax.f32 %v276, 0.0
    %v281 = vmax.f32 %v277, 0.0
    %v282 = vmax.f32 %v278, 0.0
    %v283 = vpack.c.bf16 %v279, %v279
    %v284 = vpack.c.bf16 %v280, %v280
    %v285 = vpack.c.bf16 %v281, %v281
    %v286 = vpack.c.bf16 %v282, %v282
    %v287 = vunpack.c.l.bf16 %v283
    %v288 = vunpack.c.l.bf16 %v284
    %v289 = vunpack.c.l.bf16 %v285
    %v290 = vunpack.c.l.bf16 %v286
    %v291 = vmul.f32 %v287, %v61
    %v292 = vmul.f32 %v288, %v61
    %v293 = vmul.f32 %v289, %v61
    %v294 = vmul.f32 %v290, %v61
    %v295 = vpack.c.bf16 %v291, %v291
    %v296 = vpack.c.bf16 %v292, %v292
    %v297 = vpack.c.bf16 %v293, %v293
    %v298 = vpack.c.bf16 %v294, %v294
    %v299 = vunpack.c.l.bf16 %v295
    %v300 = vunpack.c.l.bf16 %v296
    %v301 = vunpack.c.l.bf16 %v297
    %v302 = vunpack.c.l.bf16 %v298
    %v303 = vadd.f32 %v299, %v78
    %v304 = vadd.f32 %v300, %v78
    %v305 = vadd.f32 %v301, %v78
    %v306 = vadd.f32 %v302, %v78
    %v307 = vpack.c.bf16 %v303, %v303
    %v308 = vpack.c.bf16 %v304, %v304
    %v309 = vpack.c.bf16 %v305, %v305
    %v310 = vpack.c.bf16 %v306, %v306
    %v311 = vunpack.c.l.bf16 %v307
    %v312 = vunpack.c.l.bf16 %v308
    %v313 = vunpack.c.l.bf16 %v309
    %v314 = vunpack.c.l.bf16 %v310
    %v315 = vsel %vm91, %v311, -inf
    %v316 = vsel %vm91, %v312, -inf
    %v317 = vsel %vm91, %v313, -inf
    %v318 = vsel %vm91, %v314, -inf
    %v319 = vmax.f32 %v315, %v316
    %v320 = vmax.f32 %v317, %v318
    %v321 = vmax.f32 %v319, %v320
    %v322 = vpack.c.bf16 %v321, %v321
    %v323 = vunpack.c.l.bf16 %v322
    %s324 = scalar_lea.vmem [#allocation2], 8
    %325 = vst.msk [vmem:[%s324] sm:$0x3] %vm91, %v323
    %s326 = scalar_lea.vmem %s0, 20
    %v327 = vld [vmem:[%s326] sm:$0x1]
    %v328 = vld [vmem:[%s326 + $0x1] sm:$0x1]
    %v329 = vld [vmem:[%s326 + $0x2] sm:$0x1]
    %v330 = vld [vmem:[%s326 + $0x3] sm:$0x1]
    %v331 = vunpack.c.l.bf16 %v327
    %v332 = vunpack.c.l.bf16 %v328
    %v333 = vunpack.c.l.bf16 %v329
    %v334 = vunpack.c.l.bf16 %v330
    %v335 = vmax.f32 %v331, 0.0
    %v336 = vmax.f32 %v332, 0.0
    %v337 = vmax.f32 %v333, 0.0
    %v338 = vmax.f32 %v334, 0.0
    %v339 = vpack.c.bf16 %v335, %v335
    %v340 = vpack.c.bf16 %v336, %v336
    %v341 = vpack.c.bf16 %v337, %v337
    %v342 = vpack.c.bf16 %v338, %v338
    %v343 = vunpack.c.l.bf16 %v339
    %v344 = vunpack.c.l.bf16 %v340
    %v345 = vunpack.c.l.bf16 %v341
    %v346 = vunpack.c.l.bf16 %v342
    %v347 = vmul.f32 %v343, %v61
    %v348 = vmul.f32 %v344, %v61
    %v349 = vmul.f32 %v345, %v61
    %v350 = vmul.f32 %v346, %v61
    %v351 = vpack.c.bf16 %v347, %v347
    %v352 = vpack.c.bf16 %v348, %v348
    %v353 = vpack.c.bf16 %v349, %v349
    %v354 = vpack.c.bf16 %v350, %v350
    %v355 = vunpack.c.l.bf16 %v351
    %v356 = vunpack.c.l.bf16 %v352
    %v357 = vunpack.c.l.bf16 %v353
    %v358 = vunpack.c.l.bf16 %v354
    %v359 = vadd.f32 %v355, %v78
    %v360 = vadd.f32 %v356, %v78
    %v361 = vadd.f32 %v357, %v78
    %v362 = vadd.f32 %v358, %v78
    %v363 = vpack.c.bf16 %v359, %v359
    %v364 = vpack.c.bf16 %v360, %v360
    %v365 = vpack.c.bf16 %v361, %v361
    %v366 = vpack.c.bf16 %v362, %v362
    %v367 = vunpack.c.l.bf16 %v363
    %v368 = vunpack.c.l.bf16 %v364
    %v369 = vunpack.c.l.bf16 %v365
    %v370 = vunpack.c.l.bf16 %v366
    %v371 = vsel %vm91, %v367, -inf
    %v372 = vsel %vm91, %v368, -inf
    %v373 = vsel %vm91, %v369, -inf
    %v374 = vsel %vm91, %v370, -inf
    %v375 = vmax.f32 %v371, %v372
    %v376 = vmax.f32 %v373, %v374
    %v377 = vmax.f32 %v375, %v376
    %v378 = vpack.c.bf16 %v377, %v377
    %v379 = vunpack.c.l.bf16 %v378
    %s380 = scalar_lea.vmem [#allocation2], 10
    %381 = vst.msk [vmem:[%s380] sm:$0x3] %vm91, %v379
    %s382 = scalar_lea.vmem %s0, 24
    %v383 = vld [vmem:[%s382] sm:$0x1]
    %v384 = vld [vmem:[%s382 + $0x1] sm:$0x1]
    %v385 = vld [vmem:[%s382 + $0x2] sm:$0x1]
    %v386 = vld [vmem:[%s382 + $0x3] sm:$0x1]
    %v387 = vunpack.c.l.bf16 %v383
    %v388 = vunpack.c.l.bf16 %v384
    %v389 = vunpack.c.l.bf16 %v385
    %v390 = vunpack.c.l.bf16 %v386
    %v391 = vmax.f32 %v387, 0.0
    %v392 = vmax.f32 %v388, 0.0
    %v393 = vmax.f32 %v389, 0.0
    %v394 = vmax.f32 %v390, 0.0
    %v395 = vpack.c.bf16 %v391, %v391
    %v396 = vpack.c.bf16 %v392, %v392
    %v397 = vpack.c.bf16 %v393, %v393
    %v398 = vpack.c.bf16 %v394, %v394
    %v399 = vunpack.c.l.bf16 %v395
    %v400 = vunpack.c.l.bf16 %v396
    %v401 = vunpack.c.l.bf16 %v397
    %v402 = vunpack.c.l.bf16 %v398
    %v403 = vmul.f32 %v399, %v61
    %v404 = vmul.f32 %v400, %v61
    %v405 = vmul.f32 %v401, %v61
    %v406 = vmul.f32 %v402, %v61
    %v407 = vpack.c.bf16 %v403, %v403
    %v408 = vpack.c.bf16 %v404, %v404
    %v409 = vpack.c.bf16 %v405, %v405
    %v410 = vpack.c.bf16 %v406, %v406
    %v411 = vunpack.c.l.bf16 %v407
    %v412 = vunpack.c.l.bf16 %v408
    %v413 = vunpack.c.l.bf16 %v409
    %v414 = vunpack.c.l.bf16 %v410
    %v415 = vadd.f32 %v411, %v78
    %v416 = vadd.f32 %v412, %v78
    %v417 = vadd.f32 %v413, %v78
    %v418 = vadd.f32 %v414, %v78
    %v419 = vpack.c.bf16 %v415, %v415
    %v420 = vpack.c.bf16 %v416, %v416
    %v421 = vpack.c.bf16 %v417, %v417
    %v422 = vpack.c.bf16 %v418, %v418
    %v423 = vunpack.c.l.bf16 %v419
    %v424 = vunpack.c.l.bf16 %v420
    %v425 = vunpack.c.l.bf16 %v421
    %v426 = vunpack.c.l.bf16 %v422
    %v427 = vsel %vm91, %v423, -inf
    %v428 = vsel %vm91, %v424, -inf
    %v429 = vsel %vm91, %v425, -inf
    %v430 = vsel %vm91, %v426, -inf
    %v431 = vmax.f32 %v427, %v428
    %v432 = vmax.f32 %v429, %v430
    %v433 = vmax.f32 %v431, %v432
    %v434 = vpack.c.bf16 %v433, %v433
    %v435 = vunpack.c.l.bf16 %v434
    %s436 = scalar_lea.vmem [#allocation2], 12
    %437 = vst.msk [vmem:[%s436] sm:$0x3] %vm91, %v435
    %s438 = scalar_lea.vmem %s0, 28
    %v439 = vld [vmem:[%s438] sm:$0x1]
    %v440 = vld [vmem:[%s438 + $0x1] sm:$0x1]
    %v441 = vld [vmem:[%s438 + $0x2] sm:$0x1]
    %v442 = vld [vmem:[%s438 + $0x3] sm:$0x1]
    %v443 = vunpack.c.l.bf16 %v439
    %v444 = vunpack.c.l.bf16 %v440
    %v445 = vunpack.c.l.bf16 %v441
    %v446 = vunpack.c.l.bf16 %v442
    %v447 = vmax.f32 %v443, 0.0
    %v448 = vmax.f32 %v444, 0.0
    %v449 = vmax.f32 %v445, 0.0
    %v450 = vmax.f32 %v446, 0.0
    %v451 = vpack.c.bf16 %v447, %v447
    %v452 = vpack.c.bf16 %v448, %v448
    %v453 = vpack.c.bf16 %v449, %v449
    %v454 = vpack.c.bf16 %v450, %v450
    %v455 = vunpack.c.l.bf16 %v451
    %v456 = vunpack.c.l.bf16 %v452
    %v457 = vunpack.c.l.bf16 %v453
    %v458 = vunpack.c.l.bf16 %v454
    %v459 = vmul.f32 %v455, %v61
    %v460 = vmul.f32 %v456, %v61
    %v461 = vmul.f32 %v457, %v61
    %v462 = vmul.f32 %v458, %v61
    %v463 = vpack.c.bf16 %v459, %v459
    %v464 = vpack.c.bf16 %v460, %v460
    %v465 = vpack.c.bf16 %v461, %v461
    %v466 = vpack.c.bf16 %v462, %v462
    %v467 = vunpack.c.l.bf16 %v463
    %v468 = vunpack.c.l.bf16 %v464
    %v469 = vunpack.c.l.bf16 %v465
    %v470 = vunpack.c.l.bf16 %v466
    %v471 = vadd.f32 %v467, %v78
    %v472 = vadd.f32 %v468, %v78
    %v473 = vadd.f32 %v469, %v78
    %v474 = vadd.f32 %v470, %v78
    %v475 = vpack.c.bf16 %v471, %v471
    %v476 = vpack.c.bf16 %v472, %v472
    %v477 = vpack.c.bf16 %v473, %v473
    %v478 = vpack.c.bf16 %v474, %v474
    %v479 = vunpack.c.l.bf16 %v475
    %v480 = vunpack.c.l.bf16 %v476
    %v481 = vunpack.c.l.bf16 %v477
    %v482 = vunpack.c.l.bf16 %v478
    %v483 = vsel %vm91, %v479, -inf
    %v484 = vsel %vm91, %v480, -inf
    %v485 = vsel %vm91, %v481, -inf
    %v486 = vsel %vm91, %v482, -inf
    %v487 = vmax.f32 %v483, %v484
    %v488 = vmax.f32 %v485, %v486
    %v489 = vmax.f32 %v487, %v488
    %v490 = vpack.c.bf16 %v489, %v489
    %v491 = vunpack.c.l.bf16 %v490
    %s492 = scalar_lea.vmem [#allocation2], 14
    %493 = vst.msk [vmem:[%s492] sm:$0x3] %vm91, %v491
    %s494 = scalar_lea.vmem %s0, 32
    %v495 = vld [vmem:[%s494] sm:$0x1]
    %v496 = vld [vmem:[%s494 + $0x1] sm:$0x1]
    %v497 = vld [vmem:[%s494 + $0x2] sm:$0x1]
    %v498 = vld [vmem:[%s494 + $0x3] sm:$0x1]
    %v499 = vunpack.c.l.bf16 %v495
    %v500 = vunpack.c.l.bf16 %v496
    %v501 = vunpack.c.l.bf16 %v497
    %v502 = vunpack.c.l.bf16 %v498
    %v503 = vmax.f32 %v499, 0.0
    %v504 = vmax.f32 %v500, 0.0
    %v505 = vmax.f32 %v501, 0.0
    %v506 = vmax.f32 %v502, 0.0
    %v507 = vpack.c.bf16 %v503, %v503
    %v508 = vpack.c.bf16 %v504, %v504
    %v509 = vpack.c.bf16 %v505, %v505
    %v510 = vpack.c.bf16 %v506, %v506
    %v511 = vunpack.c.l.bf16 %v507
    %v512 = vunpack.c.l.bf16 %v508
    %v513 = vunpack.c.l.bf16 %v509
    %v514 = vunpack.c.l.bf16 %v510
    %v515 = vmul.f32 %v511, %v61
    %v516 = vmul.f32 %v512, %v61
    %v517 = vmul.f32 %v513, %v61
    %v518 = vmul.f32 %v514, %v61
    %v519 = vpack.c.bf16 %v515, %v515
    %v520 = vpack.c.bf16 %v516, %v516
    %v521 = vpack.c.bf16 %v517, %v517
    %v522 = vpack.c.bf16 %v518, %v518
    %v523 = vunpack.c.l.bf16 %v519
    %v524 = vunpack.c.l.bf16 %v520
    %v525 = vunpack.c.l.bf16 %v521
    %v526 = vunpack.c.l.bf16 %v522
    %v527 = vadd.f32 %v523, %v78
    %v528 = vadd.f32 %v524, %v78
    %v529 = vadd.f32 %v525, %v78
    %v530 = vadd.f32 %v526, %v78
    %v531 = vpack.c.bf16 %v527, %v527
    %v532 = vpack.c.bf16 %v528, %v528
    %v533 = vpack.c.bf16 %v529, %v529
    %v534 = vpack.c.bf16 %v530, %v530
    %v535 = vunpack.c.l.bf16 %v531
    %v536 = vunpack.c.l.bf16 %v532
    %v537 = vunpack.c.l.bf16 %v533
    %v538 = vunpack.c.l.bf16 %v534
    %v539 = vsel %vm91, %v535, -inf
    %v540 = vsel %vm91, %v536, -inf
    %v541 = vsel %vm91, %v537, -inf
    %v542 = vsel %vm91, %v538, -inf
    %v543 = vmax.f32 %v539, %v540
    %v544 = vmax.f32 %v541, %v542
    %v545 = vmax.f32 %v543, %v544
    %v546 = vpack.c.bf16 %v545, %v545
    %v547 = vunpack.c.l.bf16 %v546
    %s548 = scalar_lea.vmem [#allocation2], 16
    %549 = vst.msk [vmem:[%s548] sm:$0x3] %vm91, %v547
    %s550 = scalar_lea.vmem %s0, 36
    %v551 = vld [vmem:[%s550] sm:$0x1]
    %v552 = vld [vmem:[%s550 + $0x1] sm:$0x1]
    %v553 = vld [vmem:[%s550 + $0x2] sm:$0x1]
    %v554 = vld [vmem:[%s550 + $0x3] sm:$0x1]
    %v555 = vunpack.c.l.bf16 %v551
    %v556 = vunpack.c.l.bf16 %v552
    %v557 = vunpack.c.l.bf16 %v553
    %v558 = vunpack.c.l.bf16 %v554
    %v559 = vmax.f32 %v555, 0.0
    %v560 = vmax.f32 %v556, 0.0
    %v561 = vmax.f32 %v557, 0.0
    %v562 = vmax.f32 %v558, 0.0
    %v563 = vpack.c.bf16 %v559, %v559
    %v564 = vpack.c.bf16 %v560, %v560
    %v565 = vpack.c.bf16 %v561, %v561
    %v566 = vpack.c.bf16 %v562, %v562
    %v567 = vunpack.c.l.bf16 %v563
    %v568 = vunpack.c.l.bf16 %v564
    %v569 = vunpack.c.l.bf16 %v565
    %v570 = vunpack.c.l.bf16 %v566
    %v571 = vmul.f32 %v567, %v61
    %v572 = vmul.f32 %v568, %v61
    %v573 = vmul.f32 %v569, %v61
    %v574 = vmul.f32 %v570, %v61
    %v575 = vpack.c.bf16 %v571, %v571
    %v576 = vpack.c.bf16 %v572, %v572
    %v577 = vpack.c.bf16 %v573, %v573
    %v578 = vpack.c.bf16 %v574, %v574
    %v579 = vunpack.c.l.bf16 %v575
    %v580 = vunpack.c.l.bf16 %v576
    %v581 = vunpack.c.l.bf16 %v577
    %v582 = vunpack.c.l.bf16 %v578
    %v583 = vadd.f32 %v579, %v78
    %v584 = vadd.f32 %v580, %v78
    %v585 = vadd.f32 %v581, %v78
    %v586 = vadd.f32 %v582, %v78
    %v587 = vpack.c.bf16 %v583, %v583
    %v588 = vpack.c.bf16 %v584, %v584
    %v589 = vpack.c.bf16 %v585, %v585
    %v590 = vpack.c.bf16 %v586, %v586
    %v591 = vunpack.c.l.bf16 %v587
    %v592 = vunpack.c.l.bf16 %v588
    %v593 = vunpack.c.l.bf16 %v589
    %v594 = vunpack.c.l.bf16 %v590
    %v595 = vsel %vm91, %v591, -inf
    %v596 = vsel %vm91, %v592, -inf
    %v597 = vsel %vm91, %v593, -inf
    %v598 = vsel %vm91, %v594, -inf
    %v599 = vmax.f32 %v595, %v596
    %v600 = vmax.f32 %v597, %v598
    %v601 = vmax.f32 %v599, %v600
    %v602 = vpack.c.bf16 %v601, %v601
    %v603 = vunpack.c.l.bf16 %v602
    %s604 = scalar_lea.vmem [#allocation2], 18
    %605 = vst.msk [vmem:[%s604] sm:$0x3] %vm91, %v603
    %s606 = scalar_lea.vmem %s0, 40
    %v607 = vld [vmem:[%s606] sm:$0x1]
    %v608 = vld [vmem:[%s606 + $0x1] sm:$0x1]
    %v609 = vld [vmem:[%s606 + $0x2] sm:$0x1]
    %v610 = vld [vmem:[%s606 + $0x3] sm:$0x1]
    %v611 = vunpack.c.l.bf16 %v607
    %v612 = vunpack.c.l.bf16 %v608
    %v613 = vunpack.c.l.bf16 %v609
    %v614 = vunpack.c.l.bf16 %v610
    %v615 = vmax.f32 %v611, 0.0
    %v616 = vmax.f32 %v612, 0.0
    %v617 = vmax.f32 %v613, 0.0
    %v618 = vmax.f32 %v614, 0.0
    %v619 = vpack.c.bf16 %v615, %v615
    %v620 = vpack.c.bf16 %v616, %v616
    %v621 = vpack.c.bf16 %v617, %v617
    %v622 = vpack.c.bf16 %v618, %v618
    %v623 = vunpack.c.l.bf16 %v619
    %v624 = vunpack.c.l.bf16 %v620
    %v625 = vunpack.c.l.bf16 %v621
    %v626 = vunpack.c.l.bf16 %v622
    %v627 = vmul.f32 %v623, %v61
    %v628 = vmul.f32 %v624, %v61
    %v629 = vmul.f32 %v625, %v61
    %v630 = vmul.f32 %v626, %v61
    %v631 = vpack.c.bf16 %v627, %v627
    %v632 = vpack.c.bf16 %v628, %v628
    %v633 = vpack.c.bf16 %v629, %v629
    %v634 = vpack.c.bf16 %v630, %v630
    %v635 = vunpack.c.l.bf16 %v631
    %v636 = vunpack.c.l.bf16 %v632
    %v637 = vunpack.c.l.bf16 %v633
    %v638 = vunpack.c.l.bf16 %v634
    %v639 = vadd.f32 %v635, %v78
    %v640 = vadd.f32 %v636, %v78
    %v641 = vadd.f32 %v637, %v78
    %v642 = vadd.f32 %v638, %v78
    %v643 = vpack.c.bf16 %v639, %v639
    %v644 = vpack.c.bf16 %v640, %v640
    %v645 = vpack.c.bf16 %v641, %v641
    %v646 = vpack.c.bf16 %v642, %v642
    %v647 = vunpack.c.l.bf16 %v643
    %v648 = vunpack.c.l.bf16 %v644
    %v649 = vunpack.c.l.bf16 %v645
    %v650 = vunpack.c.l.bf16 %v646
    %v651 = vsel %vm91, %v647, -inf
    %v652 = vsel %vm91, %v648, -inf
    %v653 = vsel %vm91, %v649, -inf
    %v654 = vsel %vm91, %v650, -inf
    %v655 = vmax.f32 %v651, %v652
    %v656 = vmax.f32 %v653, %v654
    %v657 = vmax.f32 %v655, %v656
    %v658 = vpack.c.bf16 %v657, %v657
    %v659 = vunpack.c.l.bf16 %v658
    %s660 = scalar_lea.vmem [#allocation2], 20
    %661 = vst.msk [vmem:[%s660] sm:$0x3] %vm91, %v659
    %s662 = scalar_lea.vmem %s0, 44
    %v663 = vld [vmem:[%s662] sm:$0x1]
    %v664 = vld [vmem:[%s662 + $0x1] sm:$0x1]
    %v665 = vld [vmem:[%s662 + $0x2] sm:$0x1]
    %v666 = vld [vmem:[%s662 + $0x3] sm:$0x1]
    %v667 = vunpack.c.l.bf16 %v663
    %v668 = vunpack.c.l.bf16 %v664
    %v669 = vunpack.c.l.bf16 %v665
    %v670 = vunpack.c.l.bf16 %v666
    %v671 = vmax.f32 %v667, 0.0
    %v672 = vmax.f32 %v668, 0.0
    %v673 = vmax.f32 %v669, 0.0
    %v674 = vmax.f32 %v670, 0.0
    %v675 = vpack.c.bf16 %v671, %v671
    %v676 = vpack.c.bf16 %v672, %v672
    %v677 = vpack.c.bf16 %v673, %v673
    %v678 = vpack.c.bf16 %v674, %v674
    %v679 = vunpack.c.l.bf16 %v675
    %v680 = vunpack.c.l.bf16 %v676
    %v681 = vunpack.c.l.bf16 %v677
    %v682 = vunpack.c.l.bf16 %v678
    %v683 = vmul.f32 %v679, %v61
    %v684 = vmul.f32 %v680, %v61
    %v685 = vmul.f32 %v681, %v61
    %v686 = vmul.f32 %v682, %v61
    %v687 = vpack.c.bf16 %v683, %v683
    %v688 = vpack.c.bf16 %v684, %v684
    %v689 = vpack.c.bf16 %v685, %v685
    %v690 = vpack.c.bf16 %v686, %v686
    %v691 = vunpack.c.l.bf16 %v687
    %v692 = vunpack.c.l.bf16 %v688
    %v693 = vunpack.c.l.bf16 %v689
    %v694 = vunpack.c.l.bf16 %v690
    %v695 = vadd.f32 %v691, %v78
    %v696 = vadd.f32 %v692, %v78
    %v697 = vadd.f32 %v693, %v78
    %v698 = vadd.f32 %v694, %v78
    %v699 = vpack.c.bf16 %v695, %v695
    %v700 = vpack.c.bf16 %v696, %v696
    %v701 = vpack.c.bf16 %v697, %v697
    %v702 = vpack.c.bf16 %v698, %v698
    %v703 = vunpack.c.l.bf16 %v699
    %v704 = vunpack.c.l.bf16 %v700
    %v705 = vunpack.c.l.bf16 %v701
    %v706 = vunpack.c.l.bf16 %v702
    %v707 = vsel %vm91, %v703, -inf
    %v708 = vsel %vm91, %v704, -inf
    %v709 = vsel %vm91, %v705, -inf
    %v710 = vsel %vm91, %v706, -inf
    %v711 = vmax.f32 %v707, %v708
    %v712 = vmax.f32 %v709, %v710
    %v713 = vmax.f32 %v711, %v712
    %v714 = vpack.c.bf16 %v713, %v713
    %v715 = vunpack.c.l.bf16 %v714
    %s716 = scalar_lea.vmem [#allocation2], 22
    %717 = vst.msk [vmem:[%s716] sm:$0x3] %vm91, %v715
    %s718 = scalar_lea.vmem %s0, 48
    %v719 = vld [vmem:[%s718] sm:$0x1]
    %v720 = vld [vmem:[%s718 + $0x1] sm:$0x1]
    %v721 = vld [vmem:[%s718 + $0x2] sm:$0x1]
    %v722 = vld [vmem:[%s718 + $0x3] sm:$0x1]
    %v723 = vunpack.c.l.bf16 %v719
    %v724 = vunpack.c.l.bf16 %v720
    %v725 = vunpack.c.l.bf16 %v721
    %v726 = vunpack.c.l.bf16 %v722
    %v727 = vmax.f32 %v723, 0.0
    %v728 = vmax.f32 %v724, 0.0
    %v729 = vmax.f32 %v725, 0.0
    %v730 = vmax.f32 %v726, 0.0
    %v731 = vpack.c.bf16 %v727, %v727
    %v732 = vpack.c.bf16 %v728, %v728
    %v733 = vpack.c.bf16 %v729, %v729
    %v734 = vpack.c.bf16 %v730, %v730
    %v735 = vunpack.c.l.bf16 %v731
    %v736 = vunpack.c.l.bf16 %v732
    %v737 = vunpack.c.l.bf16 %v733
    %v738 = vunpack.c.l.bf16 %v734
    %v739 = vmul.f32 %v735, %v61
    %v740 = vmul.f32 %v736, %v61
    %v741 = vmul.f32 %v737, %v61
    %v742 = vmul.f32 %v738, %v61
    %v743 = vpack.c.bf16 %v739, %v739
    %v744 = vpack.c.bf16 %v740, %v740
    %v745 = vpack.c.bf16 %v741, %v741
    %v746 = vpack.c.bf16 %v742, %v742
    %v747 = vunpack.c.l.bf16 %v743
    %v748 = vunpack.c.l.bf16 %v744
    %v749 = vunpack.c.l.bf16 %v745
    %v750 = vunpack.c.l.bf16 %v746
    %v751 = vadd.f32 %v747, %v78
    %v752 = vadd.f32 %v748, %v78
    %v753 = vadd.f32 %v749, %v78
    %v754 = vadd.f32 %v750, %v78
    %v755 = vpack.c.bf16 %v751, %v751
    %v756 = vpack.c.bf16 %v752, %v752
    %v757 = vpack.c.bf16 %v753, %v753
    %v758 = vpack.c.bf16 %v754, %v754
    %v759 = vunpack.c.l.bf16 %v755
    %v760 = vunpack.c.l.bf16 %v756
    %v761 = vunpack.c.l.bf16 %v757
    %v762 = vunpack.c.l.bf16 %v758
    %v763 = vsel %vm91, %v759, -inf
    %v764 = vsel %vm91, %v760, -inf
    %v765 = vsel %vm91, %v761, -inf
    %v766 = vsel %vm91, %v762, -inf
    %v767 = vmax.f32 %v763, %v764
    %v768 = vmax.f32 %v765, %v766
    %v769 = vmax.f32 %v767, %v768
    %v770 = vpack.c.bf16 %v769, %v769
    %v771 = vunpack.c.l.bf16 %v770
    %s772 = scalar_lea.vmem [#allocation2], 24
    %773 = vst.msk [vmem:[%s772] sm:$0x3] %vm91, %v771
    %s774 = scalar_lea.vmem %s0, 52
    %v775 = vld [vmem:[%s774] sm:$0x1]
    %v776 = vld [vmem:[%s774 + $0x1] sm:$0x1]
    %v777 = vld [vmem:[%s774 + $0x2] sm:$0x1]
    %v778 = vld [vmem:[%s774 + $0x3] sm:$0x1]
    %v779 = vunpack.c.l.bf16 %v775
    %v780 = vunpack.c.l.bf16 %v776
    %v781 = vunpack.c.l.bf16 %v777
    %v782 = vunpack.c.l.bf16 %v778
    %v783 = vmax.f32 %v779, 0.0
    %v784 = vmax.f32 %v780, 0.0
    %v785 = vmax.f32 %v781, 0.0
    %v786 = vmax.f32 %v782, 0.0
    %v787 = vpack.c.bf16 %v783, %v783
    %v788 = vpack.c.bf16 %v784, %v784
    %v789 = vpack.c.bf16 %v785, %v785
    %v790 = vpack.c.bf16 %v786, %v786
    %v791 = vunpack.c.l.bf16 %v787
    %v792 = vunpack.c.l.bf16 %v788
    %v793 = vunpack.c.l.bf16 %v789
    %v794 = vunpack.c.l.bf16 %v790
    %v795 = vmul.f32 %v791, %v61
    %v796 = vmul.f32 %v792, %v61
    %v797 = vmul.f32 %v793, %v61
    %v798 = vmul.f32 %v794, %v61
    %v799 = vpack.c.bf16 %v795, %v795
    %v800 = vpack.c.bf16 %v796, %v796
    %v801 = vpack.c.bf16 %v797, %v797
    %v802 = vpack.c.bf16 %v798, %v798
    %v803 = vunpack.c.l.bf16 %v799
    %v804 = vunpack.c.l.bf16 %v800
    %v805 = vunpack.c.l.bf16 %v801
    %v806 = vunpack.c.l.bf16 %v802
    %v807 = vadd.f32 %v803, %v78
    %v808 = vadd.f32 %v804, %v78
    %v809 = vadd.f32 %v805, %v78
    %v810 = vadd.f32 %v806, %v78
    %v811 = vpack.c.bf16 %v807, %v807
    %v812 = vpack.c.bf16 %v808, %v808
    %v813 = vpack.c.bf16 %v809, %v809
    %v814 = vpack.c.bf16 %v810, %v810
    %v815 = vunpack.c.l.bf16 %v811
    %v816 = vunpack.c.l.bf16 %v812
    %v817 = vunpack.c.l.bf16 %v813
    %v818 = vunpack.c.l.bf16 %v814
    %v819 = vsel %vm91, %v815, -inf
    %v820 = vsel %vm91, %v816, -inf
    %v821 = vsel %vm91, %v817, -inf
    %v822 = vsel %vm91, %v818, -inf
    %v823 = vmax.f32 %v819, %v820
    %v824 = vmax.f32 %v821, %v822
    %v825 = vmax.f32 %v823, %v824
    %v826 = vpack.c.bf16 %v825, %v825
    %v827 = vunpack.c.l.bf16 %v826
    %s828 = scalar_lea.vmem [#allocation2], 26
    %829 = vst.msk [vmem:[%s828] sm:$0x3] %vm91, %v827
    %s830 = scalar_lea.vmem %s0, 56
    %v831 = vld [vmem:[%s830] sm:$0x1]
    %v832 = vld [vmem:[%s830 + $0x1] sm:$0x1]
    %v833 = vld [vmem:[%s830 + $0x2] sm:$0x1]
    %v834 = vld [vmem:[%s830 + $0x3] sm:$0x1]
    %v835 = vunpack.c.l.bf16 %v831
    %v836 = vunpack.c.l.bf16 %v832
    %v837 = vunpack.c.l.bf16 %v833
    %v838 = vunpack.c.l.bf16 %v834
    %v839 = vmax.f32 %v835, 0.0
    %v840 = vmax.f32 %v836, 0.0
    %v841 = vmax.f32 %v837, 0.0
    %v842 = vmax.f32 %v838, 0.0
    %v843 = vpack.c.bf16 %v839, %v839
    %v844 = vpack.c.bf16 %v840, %v840
    %v845 = vpack.c.bf16 %v841, %v841
    %v846 = vpack.c.bf16 %v842, %v842
    %v847 = vunpack.c.l.bf16 %v843
    %v848 = vunpack.c.l.bf16 %v844
    %v849 = vunpack.c.l.bf16 %v845
    %v850 = vunpack.c.l.bf16 %v846
    %v851 = vmul.f32 %v847, %v61
    %v852 = vmul.f32 %v848, %v61
    %v853 = vmul.f32 %v849, %v61
    %v854 = vmul.f32 %v850, %v61
    %v855 = vpack.c.bf16 %v851, %v851
    %v856 = vpack.c.bf16 %v852, %v852
    %v857 = vpack.c.bf16 %v853, %v853
    %v858 = vpack.c.bf16 %v854, %v854
    %v859 = vunpack.c.l.bf16 %v855
    %v860 = vunpack.c.l.bf16 %v856
    %v861 = vunpack.c.l.bf16 %v857
    %v862 = vunpack.c.l.bf16 %v858
    %v863 = vadd.f32 %v859, %v78
    %v864 = vadd.f32 %v860, %v78
    %v865 = vadd.f32 %v861, %v78
    %v866 = vadd.f32 %v862, %v78
    %v867 = vpack.c.bf16 %v863, %v863
    %v868 = vpack.c.bf16 %v864, %v864
    %v869 = vpack.c.bf16 %v865, %v865
    %v870 = vpack.c.bf16 %v866, %v866
    %v871 = vunpack.c.l.bf16 %v867
    %v872 = vunpack.c.l.bf16 %v868
    %v873 = vunpack.c.l.bf16 %v869
    %v874 = vunpack.c.l.bf16 %v870
    %v875 = vsel %vm91, %v871, -inf
    %v876 = vsel %vm91, %v872, -inf
    %v877 = vsel %vm91, %v873, -inf
    %v878 = vsel %vm91, %v874, -inf
    %v879 = vmax.f32 %v875, %v876
    %v880 = vmax.f32 %v877, %v878
    %v881 = vmax.f32 %v879, %v880
    %v882 = vpack.c.bf16 %v881, %v881
    %v883 = vunpack.c.l.bf16 %v882
    %s884 = scalar_lea.vmem [#allocation2], 28
    %885 = vst.msk [vmem:[%s884] sm:$0x3] %vm91, %v883
    %s886 = scalar_lea.vmem %s0, 60
    %v887 = vld [vmem:[%s886] sm:$0x1]
    %v888 = vld [vmem:[%s886 + $0x1] sm:$0x1]
    %v889 = vld [vmem:[%s886 + $0x2] sm:$0x1]
    %v890 = vld [vmem:[%s886 + $0x3] sm:$0x1]
    %v891 = vunpack.c.l.bf16 %v887
    %v892 = vunpack.c.l.bf16 %v888
    %v893 = vunpack.c.l.bf16 %v889
    %v894 = vunpack.c.l.bf16 %v890
    %v895 = vmax.f32 %v891, 0.0
    %v896 = vmax.f32 %v892, 0.0
    %v897 = vmax.f32 %v893, 0.0
    %v898 = vmax.f32 %v894, 0.0
    %v899 = vpack.c.bf16 %v895, %v895
    %v900 = vpack.c.bf16 %v896, %v896
    %v901 = vpack.c.bf16 %v897, %v897
    %v902 = vpack.c.bf16 %v898, %v898
    %v903 = vunpack.c.l.bf16 %v899
    %v904 = vunpack.c.l.bf16 %v900
    %v905 = vunpack.c.l.bf16 %v901
    %v906 = vunpack.c.l.bf16 %v902
    %v907 = vmul.f32 %v903, %v61
    %v908 = vmul.f32 %v904, %v61
    %v909 = vmul.f32 %v905, %v61
    %v910 = vmul.f32 %v906, %v61
    %v911 = vpack.c.bf16 %v907, %v907
    %v912 = vpack.c.bf16 %v908, %v908
    %v913 = vpack.c.bf16 %v909, %v909
    %v914 = vpack.c.bf16 %v910, %v910
    %v915 = vunpack.c.l.bf16 %v911
    %v916 = vunpack.c.l.bf16 %v912
    %v917 = vunpack.c.l.bf16 %v913
    %v918 = vunpack.c.l.bf16 %v914
    %v919 = vadd.f32 %v915, %v78
    %v920 = vadd.f32 %v916, %v78
    %v921 = vadd.f32 %v917, %v78
    %v922 = vadd.f32 %v918, %v78
    %v923 = vpack.c.bf16 %v919, %v919
    %v924 = vpack.c.bf16 %v920, %v920
    %v925 = vpack.c.bf16 %v921, %v921
    %v926 = vpack.c.bf16 %v922, %v922
    %v927 = vunpack.c.l.bf16 %v923
    %v928 = vunpack.c.l.bf16 %v924
    %v929 = vunpack.c.l.bf16 %v925
    %v930 = vunpack.c.l.bf16 %v926
    %v931 = vsel %vm91, %v927, -inf
    %v932 = vsel %vm91, %v928, -inf
    %v933 = vsel %vm91, %v929, -inf
    %v934 = vsel %vm91, %v930, -inf
    %v935 = vmax.f32 %v931, %v932
    %v936 = vmax.f32 %v933, %v934
    %v937 = vmax.f32 %v935, %v936
    %v938 = vpack.c.bf16 %v937, %v937
    %v939 = vunpack.c.l.bf16 %v938
    %s940 = scalar_lea.vmem [#allocation2], 30
    %941 = vst.msk [vmem:[%s940] sm:$0x3] %vm91, %v939
    %v942 = vld [vmem:[#allocation2] sm:$0x3]
    %v943 = vld [vmem:[#allocation2 + $0x2] sm:$0x3]
    %v944 = vmax.f32 %v942, 0.0
    %v945 = vmax.f32 %v943, 0.0
    %v947 = vperm.slane %v26, 0
    %v949 = vmul.f32 %v944, %v947
    %v950 = vmul.f32 %v945, %v947
    %v952 = vperm.slane %v28, 0
    %v954 = vadd.f32 %v949, %v952
    %v955 = vadd.f32 %v950, %v952
    %v956 = vsel %vm91, %v954, -inf
    %v957 = vsel %vm91, %v955, -inf
    %v958 = vmax.f32 %v956, %v957
    %959 = vst.msk [vmem:[#allocation3] sm:$0x3] %vm91, %v958
    %v960 = vld [vmem:[%s212] sm:$0x3]
    %v961 = vld [vmem:[%s212 + $0x2] sm:$0x3]
    %v962 = vmax.f32 %v960, 0.0
    %v963 = vmax.f32 %v961, 0.0
    %v964 = vmul.f32 %v962, %v947
    %v965 = vmul.f32 %v963, %v947
    %v966 = vadd.f32 %v964, %v952
    %v967 = vadd.f32 %v965, %v952
    %v968 = vsel %vm91, %v966, -inf
    %v969 = vsel %vm91, %v967, -inf
    %v970 = vmax.f32 %v968, %v969
    %s971 = scalar_lea.vmem [#allocation3], 2
    %972 = vst.msk [vmem:[%s971] sm:$0x3] %vm91, %v970
    %v973 = vld [vmem:[%s324] sm:$0x3]
    %v974 = vld [vmem:[%s324 + $0x2] sm:$0x3]
    %v975 = vmax.f32 %v973, 0.0
    %v976 = vmax.f32 %v974, 0.0
    %v977 = vmul.f32 %v975, %v947
    %v978 = vmul.f32 %v976, %v947
    %v979 = vadd.f32 %v977, %v952
    %v980 = vadd.f32 %v978, %v952
    %v981 = vsel %vm91, %v979, -inf
    %v982 = vsel %vm91, %v980, -inf
    %v983 = vmax.f32 %v981, %v982
    %s984 = scalar_lea.vmem [#allocation3], 4
    %985 = vst.msk [vmem:[%s984] sm:$0x3] %vm91, %v983
    %v986 = vld [vmem:[%s436] sm:$0x3]
    %v987 = vld [vmem:[%s436 + $0x2] sm:$0x3]
    %v988 = vmax.f32 %v986, 0.0
    %v989 = vmax.f32 %v987, 0.0
    %v990 = vmul.f32 %v988, %v947
    %v991 = vmul.f32 %v989, %v947
    %v992 = vadd.f32 %v990, %v952
    %v993 = vadd.f32 %v991, %v952
    %v994 = vsel %vm91, %v992, -inf
    %v995 = vsel %vm91, %v993, -inf
    %v996 = vmax.f32 %v994, %v995
    %s997 = scalar_lea.vmem [#allocation3], 6
    %998 = vst.msk [vmem:[%s997] sm:$0x3] %vm91, %v996
    %v999 = vld [vmem:[%s548] sm:$0x3]
    %v1000 = vld [vmem:[%s548 + $0x2] sm:$0x3]
    %v1001 = vmax.f32 %v999, 0.0
    %v1002 = vmax.f32 %v1000, 0.0
    %v1003 = vmul.f32 %v1001, %v947
    %v1004 = vmul.f32 %v1002, %v947
    %v1005 = vadd.f32 %v1003, %v952
    %v1006 = vadd.f32 %v1004, %v952
    %v1007 = vsel %vm91, %v1005, -inf
    %v1008 = vsel %vm91, %v1006, -inf
    %v1009 = vmax.f32 %v1007, %v1008
    %s1010 = scalar_lea.vmem [#allocation3], 8
    %1011 = vst.msk [vmem:[%s1010] sm:$0x3] %vm91, %v1009
    %v1012 = vld [vmem:[%s660] sm:$0x3]
    %v1013 = vld [vmem:[%s660 + $0x2] sm:$0x3]
    %v1014 = vmax.f32 %v1012, 0.0
    %v1015 = vmax.f32 %v1013, 0.0
    %v1016 = vmul.f32 %v1014, %v947
    %v1017 = vmul.f32 %v1015, %v947
    %v1018 = vadd.f32 %v1016, %v952
    %v1019 = vadd.f32 %v1017, %v952
    %v1020 = vsel %vm91, %v1018, -inf
    %v1021 = vsel %vm91, %v1019, -inf
    %v1022 = vmax.f32 %v1020, %v1021
    %s1023 = scalar_lea.vmem [#allocation3], 10
    %1024 = vst.msk [vmem:[%s1023] sm:$0x3] %vm91, %v1022
    %v1025 = vld [vmem:[%s772] sm:$0x3]
    %v1026 = vld [vmem:[%s772 + $0x2] sm:$0x3]
    %v1027 = vmax.f32 %v1025, 0.0
    %v1028 = vmax.f32 %v1026, 0.0
    %v1029 = vmul.f32 %v1027, %v947
    %v1030 = vmul.f32 %v1028, %v947
    %v1031 = vadd.f32 %v1029, %v952
    %v1032 = vadd.f32 %v1030, %v952
    %v1033 = vsel %vm91, %v1031, -inf
    %v1034 = vsel %vm91, %v1032, -inf
    %v1035 = vmax.f32 %v1033, %v1034
    %s1036 = scalar_lea.vmem [#allocation3], 12
    %1037 = vst.msk [vmem:[%s1036] sm:$0x3] %vm91, %v1035
    %v1038 = vld [vmem:[%s884] sm:$0x3]
    %v1039 = vld [vmem:[%s884 + $0x2] sm:$0x3]
    %v1040 = vmax.f32 %v1038, 0.0
    %v1041 = vmax.f32 %v1039, 0.0
    %v1042 = vmul.f32 %v1040, %v947
    %v1043 = vmul.f32 %v1041, %v947
    %v1044 = vadd.f32 %v1042, %v952
    %v1045 = vadd.f32 %v1043, %v952
    %v1046 = vsel %vm91, %v1044, -inf
    %v1047 = vsel %vm91, %v1045, -inf
    %v1048 = vmax.f32 %v1046, %v1047
    %s1049 = scalar_lea.vmem [#allocation3], 14
    %1050 = vst.msk [vmem:[%s1049] sm:$0x3] %vm91, %v1048
    %v1051 = vld [vmem:[#allocation3] sm:$0x3]
    %v1052 = vld [vmem:[#allocation3 + $0x2] sm:$0x3]
    %v1053 = vmax.f32 %v1051, 0.0
    %v1054 = vmax.f32 %v1052, 0.0
    %v1056 = vperm.slane %v30, 0
    %v1058 = vmul.f32 %v1053, %v1056
    %v1059 = vmul.f32 %v1054, %v1056
    %v1061 = vperm.slane %v32, 0
    %v1063 = vadd.f32 %v1058, %v1061
    %v1064 = vadd.f32 %v1059, %v1061
    %v1065 = vsel %vm91, %v1063, -inf
    %v1066 = vsel %vm91, %v1064, -inf
    %v1067 = vmax.f32 %v1065, %v1066
    %1068 = vst.msk [vmem:[#allocation2] sm:$0x3] %vm91, %v1067
    %v1069 = vld [vmem:[%s984] sm:$0x3]
    %v1070 = vld [vmem:[%s984 + $0x2] sm:$0x3]
    %v1071 = vmax.f32 %v1069, 0.0
    %v1072 = vmax.f32 %v1070, 0.0
    %v1073 = vmul.f32 %v1071, %v1056
    %v1074 = vmul.f32 %v1072, %v1056
    %v1075 = vadd.f32 %v1073, %v1061
    %v1076 = vadd.f32 %v1074, %v1061
    %v1077 = vsel %vm91, %v1075, -inf
    %v1078 = vsel %vm91, %v1076, -inf
    %v1079 = vmax.f32 %v1077, %v1078
    %1080 = vst.msk [vmem:[%s156] sm:$0x3] %vm91, %v1079
    %v1081 = vld [vmem:[%s1010] sm:$0x3]
    %v1082 = vld [vmem:[%s1010 + $0x2] sm:$0x3]
    %v1083 = vmax.f32 %v1081, 0.0
    %v1084 = vmax.f32 %v1082, 0.0
    %v1085 = vmul.f32 %v1083, %v1056
    %v1086 = vmul.f32 %v1084, %v1056
    %v1087 = vadd.f32 %v1085, %v1061
    %v1088 = vadd.f32 %v1086, %v1061
    %v1089 = vsel %vm91, %v1087, -inf
    %v1090 = vsel %vm91, %v1088, -inf
    %v1091 = vmax.f32 %v1089, %v1090
    %1092 = vst.msk [vmem:[%s212] sm:$0x3] %vm91, %v1091
    %v1093 = vld [vmem:[%s1036] sm:$0x3]
    %v1094 = vld [vmem:[%s1036 + $0x2] sm:$0x3]
    %v1095 = vmax.f32 %v1093, 0.0
    %v1096 = vmax.f32 %v1094, 0.0
    %v1097 = vmul.f32 %v1095, %v1056
    %v1098 = vmul.f32 %v1096, %v1056
    %v1099 = vadd.f32 %v1097, %v1061
    %v1100 = vadd.f32 %v1098, %v1061
    %v1101 = vsel %vm91, %v1099, -inf
    %v1102 = vsel %vm91, %v1100, -inf
    %v1103 = vmax.f32 %v1101, %v1102
    %1104 = vst.msk [vmem:[%s268] sm:$0x3] %vm91, %v1103
    %v1105 = vld [vmem:[#allocation2] sm:$0x3]
    %v1106 = vld [vmem:[#allocation2 + $0x2] sm:$0x3]
    %v1107 = vmax.f32 %v1105, 0.0
    %v1108 = vmax.f32 %v1106, 0.0
    %v1110 = vperm.slane %v34, 0
    %v1112 = vmul.f32 %v1107, %v1110
    %v1113 = vmul.f32 %v1108, %v1110
    %v1115 = vperm.slane %v36, 0
    %v1117 = vadd.f32 %v1112, %v1115
    %v1118 = vadd.f32 %v1113, %v1115
    %v1119 = vsel %vm91, %v1117, -inf
    %v1120 = vsel %vm91, %v1118, -inf
    %v1121 = vmax.f32 %v1119, %v1120
    %v1122 = vld [vmem:[%s212] sm:$0x3]
    %v1123 = vld [vmem:[%s212 + $0x2] sm:$0x3]
    %v1124 = vmax.f32 %v1122, 0.0
    %v1125 = vmax.f32 %v1123, 0.0
    %v1126 = vmul.f32 %v1124, %v1110
    %v1127 = vmul.f32 %v1125, %v1110
    %v1128 = vadd.f32 %v1126, %v1115
    %v1129 = vadd.f32 %v1127, %v1115
    %v1130 = vsel %vm91, %v1128, -inf
    %v1131 = vsel %vm91, %v1129, -inf
    %v1132 = vmax.f32 %v1130, %v1131
    %v1133 = vld [vmem:[%s3] sm:$0xff]
    %v1134 = vld [vmem:[%s3 + $0x8] sm:$0xff]
    %v1135 = vld [vmem:[%s3 + $0x10] sm:$0xff]
    %v1136 = vld [vmem:[%s3 + $0x18] sm:$0xff]
    %v1137 = vld [vmem:[%s3 + $0x20] sm:$0xff]
    %v1138 = vld [vmem:[%s3 + $0x28] sm:$0xff]
    %v1139 = vld [vmem:[%s3 + $0x30] sm:$0xff]
    %v1140 = vld [vmem:[%s3 + $0x38] sm:$0xff]
    %v1141 = vld [vmem:[%s3 + $0x40] sm:$0xff]
    %v1142 = vld [vmem:[%s3 + $0x48] sm:$0xff]
    %v1143 = vld [vmem:[%s3 + $0x50] sm:$0xff]
    %v1144 = vld [vmem:[%s3 + $0x58] sm:$0xff]
    %v1145 = vld [vmem:[%s3 + $0x60] sm:$0xf]
    %s1146 = scalar_lea.vmem %s3, 104
    %v1147 = vld [vmem:[%s1146] sm:$0xff]
    %v1148 = vld [vmem:[%s1146 + $0x8] sm:$0xff]
    %v1149 = vld [vmem:[%s1146 + $0x10] sm:$0xff]
    %v1150 = vld [vmem:[%s1146 + $0x18] sm:$0xff]
    %v1151 = vld [vmem:[%s1146 + $0x20] sm:$0xff]
    %v1152 = vld [vmem:[%s1146 + $0x28] sm:$0xff]
    %v1153 = vld [vmem:[%s1146 + $0x30] sm:$0xff]
    %v1154 = vld [vmem:[%s1146 + $0x38] sm:$0xff]
    %v1155 = vld [vmem:[%s1146 + $0x40] sm:$0xff]
    %v1156 = vld [vmem:[%s1146 + $0x48] sm:$0xff]
    %v1157 = vld [vmem:[%s1146 + $0x50] sm:$0xff]
    %v1158 = vld [vmem:[%s1146 + $0x58] sm:$0xff]
    %v1159 = vld [vmem:[%s1146 + $0x60] sm:$0xf]
    %vm1160 = vcmask 818176
    %v1162 = vsel %vm1160, %v1132, 0
    %vm1164 = vcmask 1043456
    %v1166 = vsel %vm1164, %v1159, 0
    %1168 = vmatpush.msra.mxu0 0.0
    %1169 = vmatpush.msra.mxu0 0.0
    %1170 = vmatpush.msra.mxu0 0.0
    %1171 = vmatpush.msra.mxu0 %v1166
    %1172 = vmatpush.msra.mxu0 %v1158
    %1173 = vmatpush.msra.mxu0 %v1157
    %1174 = vmatpush.msra.mxu0 %v1156
    %1175 = vmatpush.msra.mxu0 %v1155
    %1176 = vmatpush.msra.mxu0 %v1154
    %1177 = vmatpush.msra.mxu0 %v1153
    %1178 = vmatpush.msra.mxu0 %v1152
    %1179 = vmatpush.msra.mxu0 %v1151
    %1180 = vmatpush.msra.mxu0 %v1150
    %1181 = vmatpush.msra.mxu0 %v1149
    %1182 = vmatpush.msra.mxu0 %v1148
    %1183 = vmatpush.msra.mxu0 %v1147
    %1184 = vmatmul.f32.gmra.mxu0 %v1162
    %v1185 = vpop.f32.mrf.mxu0
    %v1186 = vadd.f32 0.0, %v1185
    %1187 = vdwg.mxu0
    %v1189 = vsel %vm1160, %v1121, 0
    %v1192 = vsel %vm1164, %v1145, 0
    %1194 = vmatpush.msra.mxu0 0.0
    %1195 = vmatpush.msra.mxu0 0.0
    %1196 = vmatpush.msra.mxu0 0.0
    %1197 = vmatpush.msra.mxu0 %v1192
    %1198 = vmatpush.msra.mxu0 %v1144
    %1199 = vmatpush.msra.mxu0 %v1143
    %1200 = vmatpush.msra.mxu0 %v1142
    %1201 = vmatpush.msra.mxu0 %v1141
    %1202 = vmatpush.msra.mxu0 %v1140
    %1203 = vmatpush.msra.mxu0 %v1139
    %1204 = vmatpush.msra.mxu0 %v1138
    %1205 = vmatpush.msra.mxu0 %v1137
    %1206 = vmatpush.msra.mxu0 %v1136
    %1207 = vmatpush.msra.mxu0 %v1135
    %1208 = vmatpush.msra.mxu0 %v1134
    %1209 = vmatpush.msra.mxu0 %v1133
    %1210 = vmatmul.f32.gmra.mxu0 %v1189
    %v1211 = vpop.f32.mrf.mxu0
    %v1212 = vadd.f32 %v1186, %v1211
    %1213 = vdwg.mxu0
    %v1214 = vld [vmem:[%s4] sm:$0x1]
    %v1216 = vperm.slane %v1214, 0
    %v1218 = vadd.f32 %v1212, %v1216
    %1219 = vst [vmem:[#allocation4] sm:$0x3] %v1218
    // Predicated region
    $region22: #{encoder_net.1} parent=1 // pred_check
      _
    $region23: #{encoder_net.1} parent=1 // pred_check_branch
      %1221 = sbr.rel (0) target = $region25
    $region24: #{encoder_net.1} parent=1 // pred_region
      %1223 = vsyncadd [#allocation5], 0
      %s1225 = sshll.u32 [#allocation4], 4
      %s1226 = int_to_ptr.vmem [resolvable:$true] %s1225
      %s1227 = sshll.u32 %s5, 4
      %s1228 = int_to_ptr.hbm [resolvable:$true] %s1227
      %1230 = dma.vmem_to_hbm [thread:$0]  %s1226, 32, %s1228, [#allocation5]
    $region25: #{encoder_net.1} parent=1 // pred_fallthru
      _
    // Predicated region
    $region26: #{encoder_net.1} parent=1 // pred_check
      _
    $region27: #{encoder_net.1} parent=1 // pred_check_branch
      %1232 = sbr.rel (0) target = $region29
    $region28: #{encoder_net.1} parent=1 // pred_region
      %1234 = dma.done [#allocation5], 32
    $region29: #{encoder_net.1} parent=1 // pred_fallthru
      _
    %1235 = vsyncpa [#allocation5], 1

</llo_original>
